<compile_context>
chip_gen: v5e
topology: v5e:2x2
jax: 0.10.0
libtpu: 0.0.40
codegen_flags: <defaults>
</compile_context>

<pallas_src>
import functools

import jax
import jax.numpy as jnp
from jax.experimental import pallas as pl
from jax.experimental.pallas import tpu as pltpu


# ----------------------------- kernel helpers ------------------------------

def _layernorm(x, g, b, eps=1e-5):
    mu = jnp.mean(x, axis=-1, keepdims=True)
    var = jnp.mean(jnp.square(x - mu), axis=-1, keepdims=True)
    return (x - mu) * jax.lax.rsqrt(var + eps) * g + b


def tower_kernel(x_ref, in_w_ref, in_b_ref, out_w_ref, out_b_ref,
                 ln1_g_ref, ln1_b_ref, ln2_g_ref, ln2_b_ref,
                 fc_w_ref, fc_b_ref, cproj_w_ref, cproj_b_ref,
                 o_ref, *, num_heads):
    """Grid = (batch_blocks, layers). o_ref is the layer-resident activation."""
    l = pl.program_id(1)

    # Layer 0: seed the resident activation block from the embedded tokens.
    @pl.when(l == 0)
    def _():
        o_ref[...] = x_ref[...]

    bt, S, W = o_ref.shape
    H = num_heads
    dh = W // H
    scale = float(dh) ** -0.5
    bf16 = jnp.bfloat16

    x = o_ref[...].astype(jnp.float32).reshape(bt * S, W)

    # ---- attention branch: x = x + out_proj(MHA(ln_1(x))) ----
    xn = _layernorm(x, ln1_g_ref[0], ln1_b_ref[0])
    qkv = (jnp.dot(xn.astype(bf16), in_w_ref[0],
                   preferred_element_type=jnp.float32) + in_b_ref[0])
    qkv3 = qkv.reshape(bt, S, 3 * W)

    # causal mask built in-kernel (no HBM input); -1e30 underflows to 0 in exp
    rows = jax.lax.broadcasted_iota(jnp.int32, (S, S), 0)
    cols = jax.lax.broadcasted_iota(jnp.int32, (S, S), 1)
    mask = jnp.where(cols > rows, jnp.float32(-1e30), jnp.float32(0.0))[None]

    head_outs = []
    for h in range(H):                                   # static, batched over bt
        # pre-scale q (S x dh) instead of the (S x S) scores
        q_h = (qkv3[:, :, h * dh:(h + 1) * dh] * scale).astype(bf16)
        k_h = qkv3[:, :, W + h * dh:W + (h + 1) * dh].astype(bf16)
        v_h = qkv3[:, :, 2 * W + h * dh:2 * W + (h + 1) * dh].astype(bf16)
        s = jnp.einsum("bqd,bkd->bqk", q_h, k_h,
                       preferred_element_type=jnp.float32) + mask
        m = jnp.max(s, axis=-1, keepdims=True)
        p = jnp.exp(s - m)
        p = p * pl.reciprocal(jnp.sum(p, axis=-1, keepdims=True), approx=True)
        head_outs.append(jnp.einsum("bqk,bkd->bqd", p.astype(bf16), v_h,
                                    preferred_element_type=jnp.float32))
    attn = jnp.concatenate(head_outs, axis=-1).reshape(bt * S, W)
    attn = (jnp.dot(attn.astype(bf16), out_w_ref[0],
                    preferred_element_type=jnp.float32) + out_b_ref[0])
    x = x + attn

    # ---- MLP branch: x = x + c_proj(QuickGELU(c_fc(ln_2(x)))) ----
    xn2 = _layernorm(x, ln2_g_ref[0], ln2_b_ref[0])
    h1 = (jnp.dot(xn2.astype(bf16), fc_w_ref[0],
                  preferred_element_type=jnp.float32) + fc_b_ref[0])
    h1 = h1 * jax.nn.sigmoid(1.702 * h1)                 # QuickGELU (CLIP)
    mlp = (jnp.dot(h1.astype(bf16), cproj_w_ref[0],
                   preferred_element_type=jnp.float32) + cproj_b_ref[0])
    x = x + mlp

    o_ref[...] = x.reshape(bt, S, W).astype(o_ref.dtype)


def head_kernel(xe_ref, g_ref, b_ref, proj_ref, o_ref):
    """ln_final on the gathered eot tokens followed by the text projection."""
    x = xe_ref[...].astype(jnp.float32)                  # (B, W)
    xn = _layernorm(x, g_ref[...], b_ref[...])
    o_ref[...] = jnp.dot(xn.astype(jnp.bfloat16), proj_ref[...],
                         preferred_element_type=jnp.float32).astype(o_ref.dtype)


# ------------------------------ pallas wrappers ----------------------------

def _pack_blocks(blocks):
    """Stack per-layer weights to [L, ...]; matmul weights go to bf16."""
    bf16, f32 = jnp.bfloat16, jnp.float32

    def stack(name, dtype=f32):
        return jnp.stack([blk[name] for blk in blocks]).astype(dtype)

    return dict(
        in_w=stack("in_w", bf16), in_b=stack("in_b"),
        out_w=stack("out_w", bf16), out_b=stack("out_b"),
        ln1_g=stack("ln1_g"), ln1_b=stack("ln1_b"),
        ln2_g=stack("ln2_g"), ln2_b=stack("ln2_b"),
        fc_w=stack("fc_w", bf16), fc_b=stack("fc_b"),
        cproj_w=stack("cproj_w", bf16), cproj_b=stack("cproj_b"),
    )


def _pick_batch_tile(B, S_pad, max_rows=256):
    """Largest divisor of B with bt*S_pad <= max_rows, keeping >=2 batch
    blocks when possible so both v7x TensorCores get work."""
    divisors = [d for d in range(1, B + 1) if B % d == 0]
    cands = [d for d in divisors if d * S_pad <= max_rows] or [1]
    two_core = [d for d in cands if B // d >= 2]
    return max(two_core) if two_core else max(cands)


def clip_text_encode(text, params, num_heads):
    B, S = text.shape
    W = params["token_emb"].shape[1]

    # glue: embedding gather + positional add
    x = (params["token_emb"][text] + params["pos_emb"][None, :S, :]).astype(jnp.float32)

    # pad sequence length to a sublane multiple; causal mask hides padded keys
    S_pad = max(8, -(-S // 8) * 8)
    if S_pad != S:
        x = jnp.pad(x, ((0, 0), (0, S_pad - S), (0, 0)))

    packed = _pack_blocks(params["blocks"])
    L = packed["in_w"].shape[0]

    bt = _pick_batch_tile(B, S_pad)
    nb = B // bt

    # VMEM budget hint: double-buffered bf16 weights + activation intermediates
    w_bytes = 2 * (3 * W * W + W * W + 4 * W * W + 4 * W * W)
    act_bytes = 4 * (bt * S_pad) * (10 * W)
    vmem_limit = int(min(60 * 2**20, max(32 * 2**20, 6 * w_bytes + 16 * act_bytes)))

    xmap = lambda b, l: (b, 0, 0)       # activation block: constant over layers
    wmap = lambda b, l: (l, 0, 0)       # weights: follow the layer axis

    kernel = functools.partial(tower_kernel, num_heads=num_heads)
    out = pl.pallas_call(
        kernel,
        out_shape=jax.ShapeDtypeStruct((B, S_pad, W), jnp.float32),
        grid=(nb, L),
        in_specs=[
            pl.BlockSpec((bt, S_pad, W), xmap),          # x (embedded tokens)
            pl.BlockSpec((1, W, 3 * W), wmap),           # in_proj weight (bf16)
            pl.BlockSpec((1, 1, 3 * W), wmap),           # in_proj bias
            pl.BlockSpec((1, W, W), wmap),               # out_proj weight (bf16)
            pl.BlockSpec((1, 1, W), wmap),               # out_proj bias
            pl.BlockSpec((1, 1, W), wmap),               # ln_1 gamma
            pl.BlockSpec((1, 1, W), wmap),               # ln_1 beta
            pl.BlockSpec((1, 1, W), wmap),               # ln_2 gamma
            pl.BlockSpec((1, 1, W), wmap),               # ln_2 beta
            pl.BlockSpec((1, W, 4 * W), wmap),           # c_fc weight (bf16)
            pl.BlockSpec((1, 1, 4 * W), wmap),           # c_fc bias
            pl.BlockSpec((1, 4 * W, W), wmap),           # c_proj weight (bf16)
            pl.BlockSpec((1, 1, W), wmap),               # c_proj bias
        ],
        out_specs=pl.BlockSpec((bt, S_pad, W), xmap),
        compiler_params=pltpu.CompilerParams(
            dimension_semantics=("parallel", "arbitrary"),
            vmem_limit_bytes=vmem_limit),
    )(x, packed["in_w"], packed["in_b"], packed["out_w"], packed["out_b"],
      packed["ln1_g"], packed["ln1_b"], packed["ln2_g"], packed["ln2_b"],
      packed["fc_w"], packed["fc_b"], packed["cproj_w"], packed["cproj_b"])

    # glue: gather features at the argmax (eot) token position per batch element
    eot = jnp.argmax(text, axis=-1)
    xe = out[jnp.arange(B), eot]                         # (B, W)

    E = params["text_projection"].shape[1]
    return pl.pallas_call(
        head_kernel,
        out_shape=jax.ShapeDtypeStruct((B, E), jnp.float32),
    )(xe, params["ln_final_g"], params["ln_final_b"],
      params["text_projection"].astype(jnp.bfloat16))


# ------------------------------ parameters ---------------------------------

def init_params(key, *, embed_dim, context_length, vocab_size,
                transformer_width, transformer_layers):
    W, L = transformer_width, transformer_layers
    keys = iter(jax.random.split(key, 3 + L * 4))
    f32 = jnp.float32

    proj_std = (W ** -0.5) * ((2 * L) ** -0.5)
    attn_std = W ** -0.5
    fc_std = (2 * W) ** -0.5

    params = {
        "token_emb": 0.02 * jax.random.normal(next(keys), (vocab_size, W), f32),
        "pos_emb": 0.01 * jax.random.normal(next(keys), (context_length, W), f32),
        "ln_final_g": jnp.ones((1, W), f32),
        "ln_final_b": jnp.zeros((1, W), f32),
    }
    blocks = []
    for _ in range(L):
        blocks.append(dict(
            in_w=attn_std * jax.random.normal(next(keys), (W, 3 * W), f32),
            in_b=jnp.zeros((1, 3 * W), f32),
            out_w=proj_std * jax.random.normal(next(keys), (W, W), f32),
            out_b=jnp.zeros((1, W), f32),
            ln1_g=jnp.ones((1, W), f32), ln1_b=jnp.zeros((1, W), f32),
            ln2_g=jnp.ones((1, W), f32), ln2_b=jnp.zeros((1, W), f32),
            fc_w=fc_std * jax.random.normal(next(keys), (W, 4 * W), f32),
            fc_b=jnp.zeros((1, 4 * W), f32),
            cproj_w=proj_std * jax.random.normal(next(keys), (4 * W, W), f32),
            cproj_b=jnp.zeros((1, W), f32),
        ))
    params["blocks"] = blocks
    params["text_projection"] = (W ** -0.5) * jax.random.normal(
        next(keys), (W, embed_dim), f32)
    return params


# ------------------------------ pure-JAX reference --------------------------

def reference_encode(text, params, num_heads):
    B, S = text.shape
    x = params["token_emb"][text] + params["pos_emb"][None, :, :]
    W = x.shape[-1]
    dh = W // num_heads
    mask = jnp.triu(jnp.full((S, S), -jnp.inf, dtype=jnp.float32), 1)

    for blk in params["blocks"]:
        xn = _layernorm(x, blk["ln1_g"], blk["ln1_b"])
        qkv = xn @ blk["in_w"] + blk["in_b"]
        q, k, v = qkv[..., :W], qkv[..., W:2 * W], qkv[..., 2 * W:]
        q = q.reshape(B, S, num_heads, dh).transpose(0, 2, 1, 3)
        k = k.reshape(B, S, num_heads, dh).transpose(0, 2, 1, 3)
        v = v.reshape(B, S, num_heads, dh).transpose(0, 2, 1, 3)
        s = jnp.einsum("bhqd,bhkd->bhqk", q, k) * (dh ** -0.5) + mask
        p = jax.nn.softmax(s, axis=-1)
        a = jnp.einsum("bhqk,bhkd->bhqd", p, v).transpose(0, 2, 1, 3).reshape(B, S, W)
        x = x + (a @ blk["out_w"] + blk["out_b"])
        xn2 = _layernorm(x, blk["ln2_g"], blk["ln2_b"])
        h1 = xn2 @ blk["fc_w"] + blk["fc_b"]
        h1 = h1 * jax.nn.sigmoid(1.702 * h1)
        x = x + (h1 @ blk["cproj_w"] + blk["cproj_b"])

    eot = jnp.argmax(text, axis=-1)
    xe = x[jnp.arange(B), eot]
    xe = _layernorm(xe, params["ln_final_g"], params["ln_final_b"])
    return xe @ params["text_projection"]


# ----------------------------------- main -----------------------------------

if __name__ == "__main__":
    embed_dim = 32
    context_length = 8
    vocab_size = 64
    transformer_width = 32
    transformer_heads = 4
    transformer_layers = 2
    batch = 2

    root = jax.random.PRNGKey(0)
    k_params, k_text = jax.random.split(root)
    params = init_params(
        k_params,
        embed_dim=embed_dim,
        context_length=context_length,
        vocab_size=vocab_size,
        transformer_width=transformer_width,
        transformer_layers=transformer_layers,
    )
    text = jax.random.randint(
        k_text, (batch, context_length), 0, vocab_size, dtype=jnp.int32)

    encode = jax.jit(clip_text_encode, static_argnums=2)
    out = jax.block_until_ready(encode(text, params, transformer_heads))

    ref = jax.block_until_ready(reference_encode(text, params, transformer_heads))
    assert out.shape == (batch, embed_dim)
    # kernel runs matmuls in bf16 (f32 accumulation) -> mixed-precision tolerance
    assert jnp.allclose(out, ref, rtol=5e-2, atol=5e-2), "mismatch vs JAX reference"

    print("KERNEL_OK")
</pallas_src>

<mosaic_0001>
module attributes {stable_mosaic.version = 11 : i64} {
  func.func @head_kernel(%arg0: memref<2x32xf32, #tpu.memory_space<vmem>>, %arg1: memref<1x32xf32, #tpu.memory_space<vmem>>, %arg2: memref<1x32xf32, #tpu.memory_space<vmem>>, %arg3: memref<32x32xbf16, #tpu.memory_space<vmem>>, %arg4: memref<2x32xf32, #tpu.memory_space<vmem>>) attributes {dimension_semantics = [], scalar_prefetch = 0 : i64, scratch_operands = 0 : i64, tpu.core_type = #tpu.core_type<tc>} {
    %c0 = arith.constant 0 : index
    %c0_0 = arith.constant 0 : index
    %0 = vector.load %arg0[%c0, %c0_0] : memref<2x32xf32, #tpu.memory_space<vmem>>, vector<2x32xf32>
    %c0_1 = arith.constant 0 : index
    %c0_2 = arith.constant 0 : index
    %1 = vector.load %arg1[%c0_1, %c0_2] : memref<1x32xf32, #tpu.memory_space<vmem>>, vector<1x32xf32>
    %c0_3 = arith.constant 0 : index
    %c0_4 = arith.constant 0 : index
    %2 = vector.load %arg2[%c0_3, %c0_4] : memref<1x32xf32, #tpu.memory_space<vmem>>, vector<1x32xf32>
    %cst = arith.constant dense<0.000000e+00> : vector<2xf32>
    %3 = vector.multi_reduction <add>, %0, %cst [1] : vector<2x32xf32> to vector<2xf32>
    %4 = vector.shape_cast %3 : vector<2xf32> to vector<2x1xf32>
    %cst_5 = arith.constant 3.200000e+01 : f32
    %5 = vector.broadcast %cst_5 : f32 to vector<2x1xf32>
    %6 = arith.divf %4, %5 : vector<2x1xf32>
    %7 = vector.broadcast %6 : vector<2x1xf32> to vector<2x32xf32>
    %8 = arith.subf %0, %7 : vector<2x32xf32>
    %9 = arith.mulf %8, %8 : vector<2x32xf32>
    %cst_6 = arith.constant dense<0.000000e+00> : vector<2xf32>
    %10 = vector.multi_reduction <add>, %9, %cst_6 [1] : vector<2x32xf32> to vector<2xf32>
    %11 = vector.shape_cast %10 : vector<2xf32> to vector<2x1xf32>
    %cst_7 = arith.constant 3.200000e+01 : f32
    %12 = vector.broadcast %cst_7 : f32 to vector<2x1xf32>
    %13 = arith.divf %11, %12 : vector<2x1xf32>
    %14 = vector.broadcast %6 : vector<2x1xf32> to vector<2x32xf32>
    %15 = arith.subf %0, %14 : vector<2x32xf32>
    %cst_8 = arith.constant 9.99999974E-6 : f32
    %16 = vector.broadcast %cst_8 : f32 to vector<2x1xf32>
    %17 = arith.addf %13, %16 : vector<2x1xf32>
    %18 = math.rsqrt %17 : vector<2x1xf32>
    %19 = vector.broadcast %18 : vector<2x1xf32> to vector<2x32xf32>
    %20 = arith.mulf %15, %19 : vector<2x32xf32>
    %21 = vector.broadcast %1 : vector<1x32xf32> to vector<2x32xf32>
    %22 = arith.mulf %20, %21 : vector<2x32xf32>
    %23 = vector.broadcast %2 : vector<1x32xf32> to vector<2x32xf32>
    %24 = arith.addf %22, %23 : vector<2x32xf32>
    %25 = arith.truncf %24 : vector<2x32xf32> to vector<2x32xbf16>
    %c0_9 = arith.constant 0 : index
    %c0_10 = arith.constant 0 : index
    %26 = vector.load %arg3[%c0_9, %c0_10] : memref<32x32xbf16, #tpu.memory_space<vmem>>, vector<32x32xbf16>
    %cst_11 = arith.constant dense<0.000000e+00> : vector<2x32xf32>
    %27 = tpu.matmul %25, %26, %cst_11 {dimension_numbers = #tpu.dot_dimension_numbers<[1], [0], [0], [1], [0, 0, 1, 1], [], []>} : vector<2x32xbf16>, vector<32x32xbf16>, vector<2x32xf32> -> vector<2x32xf32>
    %c0_12 = arith.constant 0 : index
    %c0_13 = arith.constant 0 : index
    %28 = vector.load %arg4[%c0_12, %c0_13] : memref<2x32xf32, #tpu.memory_space<vmem>>, vector<2x32xf32>
    tpu.vector_store %arg4[%c0_12, %c0_13], %27 {strides = array<i32>} : memref<2x32xf32, #tpu.memory_space<vmem>>, vector<2x32xf32>,
    return
  }
}

module attributes {stable_mosaic.version = 11 : i64} {
  func.func @tower_kernel(%arg0: i32, %arg1: i32, %arg2: memref<1x8x32xf32, #tpu.memory_space<vmem>>, %arg3: memref<1x32x96xbf16, #tpu.memory_space<vmem>>, %arg4: memref<1x1x96xf32, #tpu.memory_space<vmem>>, %arg5: memref<1x32x32xbf16, #tpu.memory_space<vmem>>, %arg6: memref<1x1x32xf32, #tpu.memory_space<vmem>>, %arg7: memref<1x1x32xf32, #tpu.memory_space<vmem>>, %arg8: memref<1x1x32xf32, #tpu.memory_space<vmem>>, %arg9: memref<1x1x32xf32, #tpu.memory_space<vmem>>, %arg10: memref<1x1x32xf32, #tpu.memory_space<vmem>>, %arg11: memref<1x32x128xbf16, #tpu.memory_space<vmem>>, %arg12: memref<1x1x128xf32, #tpu.memory_space<vmem>>, %arg13: memref<1x128x32xbf16, #tpu.memory_space<vmem>>, %arg14: memref<1x1x32xf32, #tpu.memory_space<vmem>>, %arg15: memref<1x8x32xf32, #tpu.memory_space<vmem>>) attributes {dimension_semantics = [#tpu.dimension_semantics<parallel>, #tpu.dimension_semantics<arbitrary>], iteration_bounds = array<i64: 2, 2>, scalar_prefetch = 0 : i64, scratch_operands = 0 : i64, tpu.core_type = #tpu.core_type<tc>, window_params = [{transform_indices = @transform_0, window_bounds = array<i64: 1, 8, 32>}, {transform_indices = @transform_1, window_bounds = array<i64: 1, 32, 96>}, {transform_indices = @transform_2, window_bounds = array<i64: 1, 1, 96>}, {transform_indices = @transform_3, window_bounds = array<i64: 1, 32, 32>}, {transform_indices = @transform_4, window_bounds = array<i64: 1, 1, 32>}, {transform_indices = @transform_5, window_bounds = array<i64: 1, 1, 32>}, {transform_indices = @transform_6, window_bounds = array<i64: 1, 1, 32>}, {transform_indices = @transform_7, window_bounds = array<i64: 1, 1, 32>}, {transform_indices = @transform_8, window_bounds = array<i64: 1, 1, 32>}, {transform_indices = @transform_9, window_bounds = array<i64: 1, 32, 128>}, {transform_indices = @transform_10, window_bounds = array<i64: 1, 1, 128>}, {transform_indices = @transform_11, window_bounds = array<i64: 1, 128, 32>}, {transform_indices = @transform_12, window_bounds = array<i64: 1, 1, 32>}, {transform_indices = @transform_13, window_bounds = array<i64: 1, 8, 32>}]} {
    %c0_i32 = arith.constant 0 : i32
    %0 = arith.cmpi eq, %arg1, %c0_i32 : i32
    %1 = arith.extui %0 : i1 to i32
    %c0_i32_0 = arith.constant 0 : i32
    %2 = arith.cmpi ne, %1, %c0_i32_0 : i32
    scf.if %2 {
      %c0_79 = arith.constant 0 : index
      %c0_80 = arith.constant 0 : index
      %c0_81 = arith.constant 0 : index
      %199 = vector.load %arg2[%c0_79, %c0_80, %c0_81] : memref<1x8x32xf32, #tpu.memory_space<vmem>>, vector<1x8x32xf32>
      %c0_82 = arith.constant 0 : index
      %c0_83 = arith.constant 0 : index
      %c0_84 = arith.constant 0 : index
      %200 = vector.load %arg15[%c0_82, %c0_83, %c0_84] : memref<1x8x32xf32, #tpu.memory_space<vmem>>, vector<1x8x32xf32>
      tpu.vector_store %arg15[%c0_82, %c0_83, %c0_84], %199 {strides = array<i32>} : memref<1x8x32xf32, #tpu.memory_space<vmem>>, vector<1x8x32xf32>,
    } else {
    }
    %c0 = arith.constant 0 : index
    %c0_1 = arith.constant 0 : index
    %c0_2 = arith.constant 0 : index
    %3 = vector.load %arg15[%c0, %c0_1, %c0_2] : memref<1x8x32xf32, #tpu.memory_space<vmem>>, vector<1x8x32xf32>
    %4 = vector.shape_cast %3 : vector<1x8x32xf32> to vector<8x32xf32>
    %c0_3 = arith.constant 0 : index
    %c0_4 = arith.constant 0 : index
    %c0_5 = arith.constant 0 : index
    %5 = vector.load %arg7[%c0_3, %c0_4, %c0_5] : memref<1x1x32xf32, #tpu.memory_space<vmem>>, vector<1x1x32xf32>
    %6 = vector.shape_cast %5 : vector<1x1x32xf32> to vector<1x32xf32>
    %c0_6 = arith.constant 0 : index
    %c0_7 = arith.constant 0 : index
    %c0_8 = arith.constant 0 : index
    %7 = vector.load %arg8[%c0_6, %c0_7, %c0_8] : memref<1x1x32xf32, #tpu.memory_space<vmem>>, vector<1x1x32xf32>
    %8 = vector.shape_cast %7 : vector<1x1x32xf32> to vector<1x32xf32>
    %cst = arith.constant dense<0.000000e+00> : vector<8xf32>
    %9 = vector.multi_reduction <add>, %4, %cst [1] : vector<8x32xf32> to vector<8xf32>
    %10 = vector.shape_cast %9 : vector<8xf32> to vector<8x1xf32>
    %cst_9 = arith.constant 3.200000e+01 : f32
    %11 = vector.broadcast %cst_9 : f32 to vector<8x1xf32>
    %12 = arith.divf %10, %11 : vector<8x1xf32>
    %13 = vector.broadcast %12 : vector<8x1xf32> to vector<8x32xf32>
    %14 = arith.subf %4, %13 : vector<8x32xf32>
    %15 = arith.mulf %14, %14 : vector<8x32xf32>
    %cst_10 = arith.constant dense<0.000000e+00> : vector<8xf32>
    %16 = vector.multi_reduction <add>, %15, %cst_10 [1] : vector<8x32xf32> to vector<8xf32>
    %17 = vector.shape_cast %16 : vector<8xf32> to vector<8x1xf32>
    %cst_11 = arith.constant 3.200000e+01 : f32
    %18 = vector.broadcast %cst_11 : f32 to vector<8x1xf32>
    %19 = arith.divf %17, %18 : vector<8x1xf32>
    %20 = vector.broadcast %12 : vector<8x1xf32> to vector<8x32xf32>
    %21 = arith.subf %4, %20 : vector<8x32xf32>
    %cst_12 = arith.constant 9.99999974E-6 : f32
    %22 = vector.broadcast %cst_12 : f32 to vector<8x1xf32>
    %23 = arith.addf %19, %22 : vector<8x1xf32>
    %24 = math.rsqrt %23 : vector<8x1xf32>
    %25 = vector.broadcast %24 : vector<8x1xf32> to vector<8x32xf32>
    %26 = arith.mulf %21, %25 : vector<8x32xf32>
    %27 = vector.broadcast %6 : vector<1x32xf32> to vector<8x32xf32>
    %28 = arith.mulf %26, %27 : vector<8x32xf32>
    %29 = vector.broadcast %8 : vector<1x32xf32> to vector<8x32xf32>
    %30 = arith.addf %28, %29 : vector<8x32xf32>
    %31 = arith.truncf %30 : vector<8x32xf32> to vector<8x32xbf16>
    %c0_13 = arith.constant 0 : index
    %c0_14 = arith.constant 0 : index
    %c0_15 = arith.constant 0 : index
    %32 = vector.load %arg3[%c0_13, %c0_14, %c0_15] : memref<1x32x96xbf16, #tpu.memory_space<vmem>>, vector<1x32x96xbf16>
    %33 = vector.shape_cast %32 : vector<1x32x96xbf16> to vector<32x96xbf16>
    %cst_16 = arith.constant dense<0.000000e+00> : vector<8x96xf32>
    %34 = tpu.matmul %31, %33, %cst_16 {dimension_numbers = #tpu.dot_dimension_numbers<[1], [0], [0], [1], [0, 0, 1, 1], [], []>} : vector<8x32xbf16>, vector<32x96xbf16>, vector<8x96xf32> -> vector<8x96xf32>
    %c0_17 = arith.constant 0 : index
    %c0_18 = arith.constant 0 : index
    %c0_19 = arith.constant 0 : index
    %35 = vector.load %arg4[%c0_17, %c0_18, %c0_19] : memref<1x1x96xf32, #tpu.memory_space<vmem>>, vector<1x1x96xf32>
    %36 = vector.shape_cast %35 : vector<1x1x96xf32> to vector<1x96xf32>
    %37 = vector.broadcast %36 : vector<1x96xf32> to vector<8x96xf32>
    %38 = arith.addf %34, %37 : vector<8x96xf32>
    %39 = vector.shape_cast %38 : vector<8x96xf32> to vector<1x8x96xf32>
    %40 = tpu.iota {dimensions = array<i32: 0>} : vector<8x8xi32>
    %41 = tpu.iota {dimensions = array<i32: 1>} : vector<8x8xi32>
    %42 = arith.cmpi sgt, %41, %40 : vector<8x8xi32>
    %cst_20 = arith.constant -1.000000e+30 : f32
    %cst_21 = arith.constant 0.000000e+00 : f32
    %43 = vector.broadcast %cst_20 : f32 to vector<8x8xf32>
    %44 = vector.broadcast %cst_21 : f32 to vector<8x8xf32>
    %45 = arith.select %42, %43, %44 : vector<8x8xi1>, vector<8x8xf32>
    %46 = vector.shape_cast %45 : vector<8x8xf32> to vector<1x8x8xf32>
    %47 = vector.extract_strided_slice %39 {offsets = [0, 0, 0], sizes = [1, 8, 8], strides = [1, 1, 1]} : vector<1x8x96xf32> to vector<1x8x8xf32>
    %cst_22 = arith.constant 0.353553385 : f32
    %48 = vector.broadcast %cst_22 : f32 to vector<1x8x8xf32>
    %49 = arith.mulf %47, %48 : vector<1x8x8xf32>
    %50 = arith.truncf %49 : vector<1x8x8xf32> to vector<1x8x8xbf16>
    %51 = vector.extract_strided_slice %39 {offsets = [0, 0, 32], sizes = [1, 8, 8], strides = [1, 1, 1]} : vector<1x8x96xf32> to vector<1x8x8xf32>
    %52 = arith.truncf %51 : vector<1x8x8xf32> to vector<1x8x8xbf16>
    %53 = vector.extract_strided_slice %39 {offsets = [0, 0, 64], sizes = [1, 8, 8], strides = [1, 1, 1]} : vector<1x8x96xf32> to vector<1x8x8xf32>
    %54 = arith.truncf %53 : vector<1x8x8xf32> to vector<1x8x8xbf16>
    "tpu.trace_start"() <{level = 10 : i32, message = "bqd,bkd->bqk"}> : () -> ()
    %cst_23 = arith.constant dense<0.000000e+00> : vector<1x8x8xf32>
    %55 = tpu.matmul %50, %52, %cst_23 {dimension_numbers = #tpu.dot_dimension_numbers<[2], [2], [1], [1], [0, 0, 0, 1, 1, 1], [0], [0]>} : vector<1x8x8xbf16>, vector<1x8x8xbf16>, vector<1x8x8xf32> -> vector<1x8x8xf32>
    "tpu.trace_stop"() : () -> ()
    %56 = arith.addf %55, %46 : vector<1x8x8xf32>
    %cst_24 = arith.constant dense<0xFF800000> : vector<1x8xf32>
    %57 = vector.multi_reduction <maximumf>, %56, %cst_24 [2] : vector<1x8x8xf32> to vector<1x8xf32>
    %58 = vector.shape_cast %57 : vector<1x8xf32> to vector<1x8x1xf32>
    %59 = vector.broadcast %58 : vector<1x8x1xf32> to vector<1x8x8xf32>
    %60 = arith.subf %56, %59 : vector<1x8x8xf32>
    %61 = math.exp %60 : vector<1x8x8xf32>
    %cst_25 = arith.constant dense<0.000000e+00> : vector<1x8xf32>
    %62 = vector.multi_reduction <add>, %61, %cst_25 [2] : vector<1x8x8xf32> to vector<1x8xf32>
    %63 = vector.shape_cast %62 : vector<1x8xf32> to vector<1x8x1xf32>
    %64 = tpu.reciprocal %63 {approx = true} : vector<1x8x1xf32> -> vector<1x8x1xf32>
    %65 = vector.broadcast %64 : vector<1x8x1xf32> to vector<1x8x8xf32>
    %66 = arith.mulf %61, %65 : vector<1x8x8xf32>
    %67 = arith.truncf %66 : vector<1x8x8xf32> to vector<1x8x8xbf16>
    "tpu.trace_start"() <{level = 10 : i32, message = "bqk,bkd->bqd"}> : () -> ()
    %cst_26 = arith.constant dense<0.000000e+00> : vector<1x8x8xf32>
    %68 = tpu.matmul %67, %54, %cst_26 {dimension_numbers = #tpu.dot_dimension_numbers<[2], [1], [1], [2], [0, 0, 0, 1, 1, 2], [0], [0]>} : vector<1x8x8xbf16>, vector<1x8x8xbf16>, vector<1x8x8xf32> -> vector<1x8x8xf32>
    "tpu.trace_stop"() : () -> ()
    %69 = vector.extract_strided_slice %39 {offsets = [0, 0, 8], sizes = [1, 8, 8], strides = [1, 1, 1]} : vector<1x8x96xf32> to vector<1x8x8xf32>
    %cst_27 = arith.constant 0.353553385 : f32
    %70 = vector.broadcast %cst_27 : f32 to vector<1x8x8xf32>
    %71 = arith.mulf %69, %70 : vector<1x8x8xf32>
    %72 = arith.truncf %71 : vector<1x8x8xf32> to vector<1x8x8xbf16>
    %73 = vector.extract_strided_slice %39 {offsets = [0, 0, 40], sizes = [1, 8, 8], strides = [1, 1, 1]} : vector<1x8x96xf32> to vector<1x8x8xf32>
    %74 = arith.truncf %73 : vector<1x8x8xf32> to vector<1x8x8xbf16>
    %75 = vector.extract_strided_slice %39 {offsets = [0, 0, 72], sizes = [1, 8, 8], strides = [1, 1, 1]} : vector<1x8x96xf32> to vector<1x8x8xf32>
    %76 = arith.truncf %75 : vector<1x8x8xf32> to vector<1x8x8xbf16>
    "tpu.trace_start"() <{level = 10 : i32, message = "bqd,bkd->bqk"}> : () -> ()
    %cst_28 = arith.constant dense<0.000000e+00> : vector<1x8x8xf32>
    %77 = tpu.matmul %72, %74, %cst_28 {dimension_numbers = #tpu.dot_dimension_numbers<[2], [2], [1], [1], [0, 0, 0, 1, 1, 1], [0], [0]>} : vector<1x8x8xbf16>, vector<1x8x8xbf16>, vector<1x8x8xf32> -> vector<1x8x8xf32>
    "tpu.trace_stop"() : () -> ()
    %78 = arith.addf %77, %46 : vector<1x8x8xf32>
    %cst_29 = arith.constant dense<0xFF800000> : vector<1x8xf32>
    %79 = vector.multi_reduction <maximumf>, %78, %cst_29 [2] : vector<1x8x8xf32> to vector<1x8xf32>
    %80 = vector.shape_cast %79 : vector<1x8xf32> to vector<1x8x1xf32>
    %81 = vector.broadcast %80 : vector<1x8x1xf32> to vector<1x8x8xf32>
    %82 = arith.subf %78, %81 : vector<1x8x8xf32>
    %83 = math.exp %82 : vector<1x8x8xf32>
    %cst_30 = arith.constant dense<0.000000e+00> : vector<1x8xf32>
    %84 = vector.multi_reduction <add>, %83, %cst_30 [2] : vector<1x8x8xf32> to vector<1x8xf32>
    %85 = vector.shape_cast %84 : vector<1x8xf32> to vector<1x8x1xf32>
    %86 = tpu.reciprocal %85 {approx = true} : vector<1x8x1xf32> -> vector<1x8x1xf32>
    %87 = vector.broadcast %86 : vector<1x8x1xf32> to vector<1x8x8xf32>
    %88 = arith.mulf %83, %87 : vector<1x8x8xf32>
    %89 = arith.truncf %88 : vector<1x8x8xf32> to vector<1x8x8xbf16>
    "tpu.trace_start"() <{level = 10 : i32, message = "bqk,bkd->bqd"}> : () -> ()
    %cst_31 = arith.constant dense<0.000000e+00> : vector<1x8x8xf32>
    %90 = tpu.matmul %89, %76, %cst_31 {dimension_numbers = #tpu.dot_dimension_numbers<[2], [1], [1], [2], [0, 0, 0, 1, 1, 2], [0], [0]>} : vector<1x8x8xbf16>, vector<1x8x8xbf16>, vector<1x8x8xf32> -> vector<1x8x8xf32>
    "tpu.trace_stop"() : () -> ()
    %91 = vector.extract_strided_slice %39 {offsets = [0, 0, 16], sizes = [1, 8, 8], strides = [1, 1, 1]} : vector<1x8x96xf32> to vector<1x8x8xf32>
    %cst_32 = arith.constant 0.353553385 : f32
    %92 = vector.broadcast %cst_32 : f32 to vector<1x8x8xf32>
    %93 = arith.mulf %91, %92 : vector<1x8x8xf32>
    %94 = arith.truncf %93 : vector<1x8x8xf32> to vector<1x8x8xbf16>
    %95 = vector.extract_strided_slice %39 {offsets = [0, 0, 48], sizes = [1, 8, 8], strides = [1, 1, 1]} : vector<1x8x96xf32> to vector<1x8x8xf32>
    %96 = arith.truncf %95 : vector<1x8x8xf32> to vector<1x8x8xbf16>
    %97 = vector.extract_strided_slice %39 {offsets = [0, 0, 80], sizes = [1, 8, 8], strides = [1, 1, 1]} : vector<1x8x96xf32> to vector<1x8x8xf32>
    %98 = arith.truncf %97 : vector<1x8x8xf32> to vector<1x8x8xbf16>
    "tpu.trace_start"() <{level = 10 : i32, message = "bqd,bkd->bqk"}> : () -> ()
    %cst_33 = arith.constant dense<0.000000e+00> : vector<1x8x8xf32>
    %99 = tpu.matmul %94, %96, %cst_33 {dimension_numbers = #tpu.dot_dimension_numbers<[2], [2], [1], [1], [0, 0, 0, 1, 1, 1], [0], [0]>} : vector<1x8x8xbf16>, vector<1x8x8xbf16>, vector<1x8x8xf32> -> vector<1x8x8xf32>
    "tpu.trace_stop"() : () -> ()
    %100 = arith.addf %99, %46 : vector<1x8x8xf32>
    %cst_34 = arith.constant dense<0xFF800000> : vector<1x8xf32>
    %101 = vector.multi_reduction <maximumf>, %100, %cst_34 [2] : vector<1x8x8xf32> to vector<1x8xf32>
    %102 = vector.shape_cast %101 : vector<1x8xf32> to vector<1x8x1xf32>
    %103 = vector.broadcast %102 : vector<1x8x1xf32> to vector<1x8x8xf32>
    %104 = arith.subf %100, %103 : vector<1x8x8xf32>
    %105 = math.exp %104 : vector<1x8x8xf32>
    %cst_35 = arith.constant dense<0.000000e+00> : vector<1x8xf32>
    %106 = vector.multi_reduction <add>, %105, %cst_35 [2] : vector<1x8x8xf32> to vector<1x8xf32>
    %107 = vector.shape_cast %106 : vector<1x8xf32> to vector<1x8x1xf32>
    %108 = tpu.reciprocal %107 {approx = true} : vector<1x8x1xf32> -> vector<1x8x1xf32>
    %109 = vector.broadcast %108 : vector<1x8x1xf32> to vector<1x8x8xf32>
    %110 = arith.mulf %105, %109 : vector<1x8x8xf32>
    %111 = arith.truncf %110 : vector<1x8x8xf32> to vector<1x8x8xbf16>
    "tpu.trace_start"() <{level = 10 : i32, message = "bqk,bkd->bqd"}> : () -> ()
    %cst_36 = arith.constant dense<0.000000e+00> : vector<1x8x8xf32>
    %112 = tpu.matmul %111, %98, %cst_36 {dimension_numbers = #tpu.dot_dimension_numbers<[2], [1], [1], [2], [0, 0, 0, 1, 1, 2], [0], [0]>} : vector<1x8x8xbf16>, vector<1x8x8xbf16>, vector<1x8x8xf32> -> vector<1x8x8xf32>
    "tpu.trace_stop"() : () -> ()
    %113 = vector.extract_strided_slice %39 {offsets = [0, 0, 24], sizes = [1, 8, 8], strides = [1, 1, 1]} : vector<1x8x96xf32> to vector<1x8x8xf32>
    %cst_37 = arith.constant 0.353553385 : f32
    %114 = vector.broadcast %cst_37 : f32 to vector<1x8x8xf32>
    %115 = arith.mulf %113, %114 : vector<1x8x8xf32>
    %116 = arith.truncf %115 : vector<1x8x8xf32> to vector<1x8x8xbf16>
    %117 = vector.extract_strided_slice %39 {offsets = [0, 0, 56], sizes = [1, 8, 8], strides = [1, 1, 1]} : vector<1x8x96xf32> to vector<1x8x8xf32>
    %118 = arith.truncf %117 : vector<1x8x8xf32> to vector<1x8x8xbf16>
    %119 = vector.extract_strided_slice %39 {offsets = [0, 0, 88], sizes = [1, 8, 8], strides = [1, 1, 1]} : vector<1x8x96xf32> to vector<1x8x8xf32>
    %120 = arith.truncf %119 : vector<1x8x8xf32> to vector<1x8x8xbf16>
    "tpu.trace_start"() <{level = 10 : i32, message = "bqd,bkd->bqk"}> : () -> ()
    %cst_38 = arith.constant dense<0.000000e+00> : vector<1x8x8xf32>
    %121 = tpu.matmul %116, %118, %cst_38 {dimension_numbers = #tpu.dot_dimension_numbers<[2], [2], [1], [1], [0, 0, 0, 1, 1, 1], [0], [0]>} : vector<1x8x8xbf16>, vector<1x8x8xbf16>, vector<1x8x8xf32> -> vector<1x8x8xf32>
    "tpu.trace_stop"() : () -> ()
    %122 = arith.addf %121, %46 : vector<1x8x8xf32>
    %cst_39 = arith.constant dense<0xFF800000> : vector<1x8xf32>
    %123 = vector.multi_reduction <maximumf>, %122, %cst_39 [2] : vector<1x8x8xf32> to vector<1x8xf32>
    %124 = vector.shape_cast %123 : vector<1x8xf32> to vector<1x8x1xf32>
    %125 = vector.broadcast %124 : vector<1x8x1xf32> to vector<1x8x8xf32>
    %126 = arith.subf %122, %125 : vector<1x8x8xf32>
    %127 = math.exp %126 : vector<1x8x8xf32>
    %cst_40 = arith.constant dense<0.000000e+00> : vector<1x8xf32>
    %128 = vector.multi_reduction <add>, %127, %cst_40 [2] : vector<1x8x8xf32> to vector<1x8xf32>
    %129 = vector.shape_cast %128 : vector<1x8xf32> to vector<1x8x1xf32>
    %130 = tpu.reciprocal %129 {approx = true} : vector<1x8x1xf32> -> vector<1x8x1xf32>
    %131 = vector.broadcast %130 : vector<1x8x1xf32> to vector<1x8x8xf32>
    %132 = arith.mulf %127, %131 : vector<1x8x8xf32>
    %133 = arith.truncf %132 : vector<1x8x8xf32> to vector<1x8x8xbf16>
    "tpu.trace_start"() <{level = 10 : i32, message = "bqk,bkd->bqd"}> : () -> ()
    %cst_41 = arith.constant dense<0.000000e+00> : vector<1x8x8xf32>
    %134 = tpu.matmul %133, %120, %cst_41 {dimension_numbers = #tpu.dot_dimension_numbers<[2], [1], [1], [2], [0, 0, 0, 1, 1, 2], [0], [0]>} : vector<1x8x8xbf16>, vector<1x8x8xbf16>, vector<1x8x8xf32> -> vector<1x8x8xf32>
    "tpu.trace_stop"() : () -> ()
    %135 = tpu.concatenate %68, %90, %112, %134 in 2 : vector<1x8x8xf32>, vector<1x8x8xf32>, vector<1x8x8xf32>, vector<1x8x8xf32> -> vector<1x8x32xf32>
    %136 = vector.shape_cast %135 : vector<1x8x32xf32> to vector<8x32xf32>
    %137 = arith.truncf %136 : vector<8x32xf32> to vector<8x32xbf16>
    %c0_42 = arith.constant 0 : index
    %c0_43 = arith.constant 0 : index
    %c0_44 = arith.constant 0 : index
    %138 = vector.load %arg5[%c0_42, %c0_43, %c0_44] : memref<1x32x32xbf16, #tpu.memory_space<vmem>>, vector<1x32x32xbf16>
    %139 = vector.shape_cast %138 : vector<1x32x32xbf16> to vector<32x32xbf16>
    %cst_45 = arith.constant dense<0.000000e+00> : vector<8x32xf32>
    %140 = tpu.matmul %137, %139, %cst_45 {dimension_numbers = #tpu.dot_dimension_numbers<[1], [0], [0], [1], [0, 0, 1, 1], [], []>} : vector<8x32xbf16>, vector<32x32xbf16>, vector<8x32xf32> -> vector<8x32xf32>
    %c0_46 = arith.constant 0 : index
    %c0_47 = arith.constant 0 : index
    %c0_48 = arith.constant 0 : index
    %141 = vector.load %arg6[%c0_46, %c0_47, %c0_48] : memref<1x1x32xf32, #tpu.memory_space<vmem>>, vector<1x1x32xf32>
    %142 = vector.shape_cast %141 : vector<1x1x32xf32> to vector<1x32xf32>
    %143 = vector.broadcast %142 : vector<1x32xf32> to vector<8x32xf32>
    %144 = arith.addf %140, %143 : vector<8x32xf32>
    %145 = arith.addf %4, %144 : vector<8x32xf32>
    %c0_49 = arith.constant 0 : index
    %c0_50 = arith.constant 0 : index
    %c0_51 = arith.constant 0 : index
    %146 = vector.load %arg9[%c0_49, %c0_50, %c0_51] : memref<1x1x32xf32, #tpu.memory_space<vmem>>, vector<1x1x32xf32>
    %147 = vector.shape_cast %146 : vector<1x1x32xf32> to vector<1x32xf32>
    %c0_52 = arith.constant 0 : index
    %c0_53 = arith.constant 0 : index
    %c0_54 = arith.constant 0 : index
    %148 = vector.load %arg10[%c0_52, %c0_53, %c0_54] : memref<1x1x32xf32, #tpu.memory_space<vmem>>, vector<1x1x32xf32>
    %149 = vector.shape_cast %148 : vector<1x1x32xf32> to vector<1x32xf32>
    %cst_55 = arith.constant dense<0.000000e+00> : vector<8xf32>
    %150 = vector.multi_reduction <add>, %145, %cst_55 [1] : vector<8x32xf32> to vector<8xf32>
    %151 = vector.shape_cast %150 : vector<8xf32> to vector<8x1xf32>
    %cst_56 = arith.constant 3.200000e+01 : f32
    %152 = vector.broadcast %cst_56 : f32 to vector<8x1xf32>
    %153 = arith.divf %151, %152 : vector<8x1xf32>
    %154 = vector.broadcast %153 : vector<8x1xf32> to vector<8x32xf32>
    %155 = arith.subf %145, %154 : vector<8x32xf32>
    %156 = arith.mulf %155, %155 : vector<8x32xf32>
    %cst_57 = arith.constant dense<0.000000e+00> : vector<8xf32>
    %157 = vector.multi_reduction <add>, %156, %cst_57 [1] : vector<8x32xf32> to vector<8xf32>
    %158 = vector.shape_cast %157 : vector<8xf32> to vector<8x1xf32>
    %cst_58 = arith.constant 3.200000e+01 : f32
    %159 = vector.broadcast %cst_58 : f32 to vector<8x1xf32>
    %160 = arith.divf %158, %159 : vector<8x1xf32>
    %161 = vector.broadcast %153 : vector<8x1xf32> to vector<8x32xf32>
    %162 = arith.subf %145, %161 : vector<8x32xf32>
    %cst_59 = arith.constant 9.99999974E-6 : f32
    %163 = vector.broadcast %cst_59 : f32 to vector<8x1xf32>
    %164 = arith.addf %160, %163 : vector<8x1xf32>
    %165 = math.rsqrt %164 : vector<8x1xf32>
    %166 = vector.broadcast %165 : vector<8x1xf32> to vector<8x32xf32>
    %167 = arith.mulf %162, %166 : vector<8x32xf32>
    %168 = vector.broadcast %147 : vector<1x32xf32> to vector<8x32xf32>
    %169 = arith.mulf %167, %168 : vector<8x32xf32>
    %170 = vector.broadcast %149 : vector<1x32xf32> to vector<8x32xf32>
    %171 = arith.addf %169, %170 : vector<8x32xf32>
    %172 = arith.truncf %171 : vector<8x32xf32> to vector<8x32xbf16>
    %c0_60 = arith.constant 0 : index
    %c0_61 = arith.constant 0 : index
    %c0_62 = arith.constant 0 : index
    %173 = vector.load %arg11[%c0_60, %c0_61, %c0_62] : memref<1x32x128xbf16, #tpu.memory_space<vmem>>, vector<1x32x128xbf16>
    %174 = vector.shape_cast %173 : vector<1x32x128xbf16> to vector<32x128xbf16>
    %cst_63 = arith.constant dense<0.000000e+00> : vector<8x128xf32>
    %175 = tpu.matmul %172, %174, %cst_63 {dimension_numbers = #tpu.dot_dimension_numbers<[1], [0], [0], [1], [0, 0, 1, 1], [], []>} : vector<8x32xbf16>, vector<32x128xbf16>, vector<8x128xf32> -> vector<8x128xf32>
    %c0_64 = arith.constant 0 : index
    %c0_65 = arith.constant 0 : index
    %c0_66 = arith.constant 0 : index
    %176 = vector.load %arg12[%c0_64, %c0_65, %c0_66] : memref<1x1x128xf32, #tpu.memory_space<vmem>>, vector<1x1x128xf32>
    %177 = vector.shape_cast %176 : vector<1x1x128xf32> to vector<1x128xf32>
    %178 = vector.broadcast %177 : vector<1x128xf32> to vector<8x128xf32>
    %179 = arith.addf %175, %178 : vector<8x128xf32>
    %cst_67 = arith.constant 1.702000e+00 : f32
    %180 = vector.broadcast %cst_67 : f32 to vector<8x128xf32>
    %181 = arith.mulf %180, %179 : vector<8x128xf32>
    %182 = arith.negf %181 : vector<8x128xf32>
    %183 = math.exp %182 : vector<8x128xf32>
    %cst_68 = arith.constant 1.000000e+00 : f32
    %184 = vector.broadcast %cst_68 : f32 to vector<8x128xf32>
    %185 = arith.addf %184, %183 : vector<8x128xf32>
    %186 = arith.divf %184, %185 : vector<8x128xf32>
    %187 = arith.mulf %179, %186 : vector<8x128xf32>
    %188 = arith.truncf %187 : vector<8x128xf32> to vector<8x128xbf16>
    %c0_69 = arith.constant 0 : index
    %c0_70 = arith.constant 0 : index
    %c0_71 = arith.constant 0 : index
    %189 = vector.load %arg13[%c0_69, %c0_70, %c0_71] : memref<1x128x32xbf16, #tpu.memory_space<vmem>>, vector<1x128x32xbf16>
    %190 = vector.shape_cast %189 : vector<1x128x32xbf16> to vector<128x32xbf16>
    %cst_72 = arith.constant dense<0.000000e+00> : vector<8x32xf32>
    %191 = tpu.matmul %188, %190, %cst_72 {dimension_numbers = #tpu.dot_dimension_numbers<[1], [0], [0], [1], [0, 0, 1, 1], [], []>} : vector<8x128xbf16>, vector<128x32xbf16>, vector<8x32xf32> -> vector<8x32xf32>
    %c0_73 = arith.constant 0 : index
    %c0_74 = arith.constant 0 : index
    %c0_75 = arith.constant 0 : index
    %192 = vector.load %arg14[%c0_73, %c0_74, %c0_75] : memref<1x1x32xf32, #tpu.memory_space<vmem>>, vector<1x1x32xf32>
    %193 = vector.shape_cast %192 : vector<1x1x32xf32> to vector<1x32xf32>
    %194 = vector.broadcast %193 : vector<1x32xf32> to vector<8x32xf32>
    %195 = arith.addf %191, %194 : vector<8x32xf32>
    %196 = arith.addf %145, %195 : vector<8x32xf32>
    %197 = vector.shape_cast %196 : vector<8x32xf32> to vector<1x8x32xf32>
    %c0_76 = arith.constant 0 : index
    %c0_77 = arith.constant 0 : index
    %c0_78 = arith.constant 0 : index
    %198 = vector.load %arg15[%c0_76, %c0_77, %c0_78] : memref<1x8x32xf32, #tpu.memory_space<vmem>>, vector<1x8x32xf32>
    tpu.vector_store %arg15[%c0_76, %c0_77, %c0_78], %197 {strides = array<i32>} : memref<1x8x32xf32, #tpu.memory_space<vmem>>, vector<1x8x32xf32>,
    return
  }
  func.func @transform_0(%arg0: i32, %arg1: i32) -> (i32, i32, i32) {
    %c0_i32 = arith.constant 0 : i32
    %c0_i32_0 = arith.constant 0 : i32
    %c0_i32_1 = arith.constant 0 : i32
    return %arg0, %c0_i32, %c0_i32_0 : i32, i32, i32
  }
  func.func @transform_1(%arg0: i32, %arg1: i32) -> (i32, i32, i32) {
    %c0_i32 = arith.constant 0 : i32
    %c0_i32_0 = arith.constant 0 : i32
    %c0_i32_1 = arith.constant 0 : i32
    return %arg1, %c0_i32, %c0_i32_0 : i32, i32, i32
  }
  func.func @transform_2(%arg0: i32, %arg1: i32) -> (i32, i32, i32) {
    %c0_i32 = arith.constant 0 : i32
    %c0_i32_0 = arith.constant 0 : i32
    %c0_i32_1 = arith.constant 0 : i32
    return %arg1, %c0_i32, %c0_i32_0 : i32, i32, i32
  }
  func.func @transform_3(%arg0: i32, %arg1: i32) -> (i32, i32, i32) {
    %c0_i32 = arith.constant 0 : i32
    %c0_i32_0 = arith.constant 0 : i32
    %c0_i32_1 = arith.constant 0 : i32
    return %arg1, %c0_i32, %c0_i32_0 : i32, i32, i32
  }
  func.func @transform_4(%arg0: i32, %arg1: i32) -> (i32, i32, i32) {
    %c0_i32 = arith.constant 0 : i32
    %c0_i32_0 = arith.constant 0 : i32
    %c0_i32_1 = arith.constant 0 : i32
    return %arg1, %c0_i32, %c0_i32_0 : i32, i32, i32
  }
  func.func @transform_5(%arg0: i32, %arg1: i32) -> (i32, i32, i32) {
    %c0_i32 = arith.constant 0 : i32
    %c0_i32_0 = arith.constant 0 : i32
    %c0_i32_1 = arith.constant 0 : i32
    return %arg1, %c0_i32, %c0_i32_0 : i32, i32, i32
  }
  func.func @transform_6(%arg0: i32, %arg1: i32) -> (i32, i32, i32) {
    %c0_i32 = arith.constant 0 : i32
    %c0_i32_0 = arith.constant 0 : i32
    %c0_i32_1 = arith.constant 0 : i32
    return %arg1, %c0_i32, %c0_i32_0 : i32, i32, i32
  }
  func.func @transform_7(%arg0: i32, %arg1: i32) -> (i32, i32, i32) {
    %c0_i32 = arith.constant 0 : i32
    %c0_i32_0 = arith.constant 0 : i32
    %c0_i32_1 = arith.constant 0 : i32
    return %arg1, %c0_i32, %c0_i32_0 : i32, i32, i32
  }
  func.func @transform_8(%arg0: i32, %arg1: i32) -> (i32, i32, i32) {
    %c0_i32 = arith.constant 0 : i32
    %c0_i32_0 = arith.constant 0 : i32
    %c0_i32_1 = arith.constant 0 : i32
    return %arg1, %c0_i32, %c0_i32_0 : i32, i32, i32
  }
  func.func @transform_9(%arg0: i32, %arg1: i32) -> (i32, i32, i32) {
    %c0_i32 = arith.constant 0 : i32
    %c0_i32_0 = arith.constant 0 : i32
    %c0_i32_1 = arith.constant 0 : i32
    return %arg1, %c0_i32, %c0_i32_0 : i32, i32, i32
  }
  func.func @transform_10(%arg0: i32, %arg1: i32) -> (i32, i32, i32) {
    %c0_i32 = arith.constant 0 : i32
    %c0_i32_0 = arith.constant 0 : i32
    %c0_i32_1 = arith.constant 0 : i32
    return %arg1, %c0_i32, %c0_i32_0 : i32, i32, i32
  }
  func.func @transform_11(%arg0: i32, %arg1: i32) -> (i32, i32, i32) {
    %c0_i32 = arith.constant 0 : i32
    %c0_i32_0 = arith.constant 0 : i32
    %c0_i32_1 = arith.constant 0 : i32
    return %arg1, %c0_i32, %c0_i32_0 : i32, i32, i32
  }
  func.func @transform_12(%arg0: i32, %arg1: i32) -> (i32, i32, i32) {
    %c0_i32 = arith.constant 0 : i32
    %c0_i32_0 = arith.constant 0 : i32
    %c0_i32_1 = arith.constant 0 : i32
    return %arg1, %c0_i32, %c0_i32_0 : i32, i32, i32
  }
  func.func @transform_13(%arg0: i32, %arg1: i32) -> (i32, i32, i32) {
    %c0_i32 = arith.constant 0 : i32
    %c0_i32_0 = arith.constant 0 : i32
    %c0_i32_1 = arith.constant 0 : i32
    return %arg0, %c0_i32, %c0_i32_0 : i32, i32, i32
  }
}

</mosaic_0001>

<llo_original>
// kernel: clip_text_encode.3
$region0: #{clip_text_encode.3}
  #allocation0 [shape = 'u32[]', space=smem, size = 0x4, offset = 0x4, fixed_abs, tag = 'smem constant byte address 0x4 - core index']
  #allocation1 [shape = 'u32[72,128]{1,0:T(1,128)}', space=vmem, size = 0x9000, scoped, tag = 'internal scratch']
  %s0 = inlined_call_operand.vmem [shape: f32[2,32], index: 0, kind: input, shape index: {}]
  %s1 = inlined_call_operand.vmem [shape: f32[1,32], index: 1, kind: input, shape index: {}]
  %s2 = inlined_call_operand.vmem [shape: f32[1,32], index: 2, kind: input, shape index: {}]
  %s3 = inlined_call_operand.vmem [shape: bf16[32,32], index: 3, kind: input, shape index: {}]
  %s4 = inlined_call_operand.hbm [shape: f32[2,32], index: 4, kind: output, shape index: {}]
  %s5 = sld [smem:[#allocation0]]
  $region26: #{clip_text_encode.3} parent=0
    _
  %s7 = ssub.s32 1, %s5
  %s8 = scalar_select 0, %s7, %s5
  $region1: #{clip_text_encode.3} parent=0
    #allocation2 [shape = 'u8[1024]{0}', space=vmem, size = 0x400, scoped, tag = 'output window, operand 0, single buffered']
    #allocation3 [shape = 's32[1]{0}', space=sflag, size = 0x4, scoped, tag = 'scoped memory for clip_text_encode.3']
    %9 = vsyncpa [#allocation3], 0
    // Predicated region
    $region2: #{clip_text_encode.3} parent=1 // pred_check
      _
    $region3: #{clip_text_encode.3} parent=1 // pred_check_branch
      %11 = sbr.rel (0) target = $region5
    $region4: #{clip_text_encode.3} parent=1 // pred_region
      _
    $region5: #{clip_text_encode.3} parent=1 // pred_fallthru
      _
    // Predicated region
    $region6: #{clip_text_encode.3} parent=1 // pred_check
      _
    $region7: #{clip_text_encode.3} parent=1 // pred_check_branch
      %13 = sbr.rel (0) target = $region9
    $region8: #{clip_text_encode.3} parent=1 // pred_region
      _
    $region9: #{clip_text_encode.3} parent=1 // pred_fallthru
      _
    // Predicated region
    $region10: #{clip_text_encode.3} parent=1 // pred_check
      _
    $region11: #{clip_text_encode.3} parent=1 // pred_check_branch
      %15 = sbr.rel (0) target = $region13
    $region12: #{clip_text_encode.3} parent=1 // pred_region
      _
    $region13: #{clip_text_encode.3} parent=1 // pred_fallthru
      _
    // Predicated region
    $region14: #{clip_text_encode.3} parent=1 // pred_check
      _
    $region15: #{clip_text_encode.3} parent=1 // pred_check_branch
      %17 = sbr.rel (0) target = $region17
    $region16: #{clip_text_encode.3} parent=1 // pred_region
      _
    $region17: #{clip_text_encode.3} parent=1 // pred_fallthru
      _
    %v19 = vld [vmem:[%s0] sm:$0x3]
    %v20 = vld [vmem:[%s1] sm:$0x1]
    %v21 = vld [vmem:[%s2] sm:$0x1]
    %vm22 = vcmask 254976
    %v23 = vsel %vm22, %v19, 0.0
    %24 = vadd.xlane.f32.xlu0 %v23
    %v25 = vpop.xlane.xlu0 %24
    %v26 = vrcp.pop 32.0
    %v27 = vmul.f32 32.0, %v26
    %v28 = vsub.f32 1.0, %v27
    %v29 = vmul.f32 %v26, %v28
    %v30 = vadd.f32 %v26, %v29
    %vm31 = vweird.f32 %v26
    %v32 = vsel %vm31, %v26, %v30
    %v33 = vmul.f32 %v25, %v32
    %v34 = vsub.f32 %v19, %v33
    %v35 = vmul.f32 %v34, %v34
    %v36 = vsel %vm22, %v35, 0.0
    %37 = vadd.xlane.f32.xlu0 %v36
    %v38 = vpop.xlane.xlu0 %37
    %v39 = vmul.f32 %v38, %v32
    %v40 = vadd.f32 %v39, 1e-05
    %v41 = vrsqrt.pop %v40
    %v42 = vmul.f32 %v41, %v40
    %v43 = vmul.f32 %v42, %v41
    %v44 = vmul.f32 0.5, %v43
    %v45 = vsub.f32 1.5, %v44
    %v46 = vmul.f32 %v41, %v45
    %vm47 = vweird.f32 %v40
    %vm48 = vweird.f32 %v41
    %vm49 = vmor %vm47, %vm48
    %v50 = vsel %vm49, %v41, %v46
    %v51 = vmul.f32 %v34, %v50
    %v53 = vperm.slane %v20, 0
    %v55 = vmul.f32 %v51, %v53
    %v57 = vperm.slane %v21, 0
    %v59 = vadd.f32 %v55, %v57
    %v60 = vpack.c.bf16 %v59, %v59
    %v61 = vld [vmem:[%s3] sm:$0xf]
    %v62 = vld [vmem:[%s3 + $0x4] sm:$0xf]
    %v63 = vld [vmem:[%s3 + $0x8] sm:$0xf]
    %v64 = vld [vmem:[%s3 + $0xc] sm:$0xf]
    %v69 = vunpack.c.l.b16 %v61
    %v70 = vunpack.c.l.b16 %v62
    %v71 = vunpack.c.l.b16 %v63
    %v72 = vunpack.c.l.b16 %v64
    %v73 = vpack.c.b16 %v70, %v69
    %v74 = vpack.c.b16 %v72, %v71
    %vm77 = vcmask 261120
    %v79 = vsel %vm77, %v60, 0
    %81 = vmatpush.bf16.msra.mxu0 0
    %82 = vmatpush.bf16.msra.mxu0 0
    %83 = vmatpush.bf16.msra.mxu0 0
    %84 = vmatpush.bf16.msra.mxu0 0
    %85 = vmatpush.bf16.msra.mxu0 0
    %86 = vmatpush.bf16.msra.mxu0 0
    %87 = vmatpush.bf16.msra.mxu0 %v74
    %88 = vmatpush.bf16.msra.mxu0 %v73
    %89 = vmatmul.bf16.gmra.mxu0 %v79
    %v90 = vpop.f32.mrf.mxu0
    %v91 = vadd.f32 0.0, %v90
    %v92 = vpop.f32.mrf.mxu0
    %93 = vdwg.mxu0
    %94 = vst.msk [vmem:[#allocation2] sm:$0x3] %vm22, %v91
    // Predicated region
    $region18: #{clip_text_encode.3} parent=1 // pred_check
      _
    $region19: #{clip_text_encode.3} parent=1 // pred_check_branch
      %96 = sbr.rel (0) target = $region21
    $region20: #{clip_text_encode.3} parent=1 // pred_region
      %98 = vsyncadd [#allocation3], 0
      %s100 = sshll.u32 [#allocation2], 4
      %s101 = int_to_ptr.vmem [resolvable:$true] %s100
      %s102 = sshll.u32 %s4, 4
      %s103 = int_to_ptr.hbm [resolvable:$true] %s102
      %105 = dma.vmem_to_hbm [thread:$0]  %s101, 32, %s103, [#allocation3]
    $region21: #{clip_text_encode.3} parent=1 // pred_fallthru
      _
    // Predicated region
    $region22: #{clip_text_encode.3} parent=1 // pred_check
      _
    $region23: #{clip_text_encode.3} parent=1 // pred_check_branch
      %107 = sbr.rel (0) target = $region25
    $region24: #{clip_text_encode.3} parent=1 // pred_region
      %109 = dma.done [#allocation3], 32
    $region25: #{clip_text_encode.3} parent=1 // pred_fallthru
      _
    %110 = vsyncpa [#allocation3], 1

// kernel: clip_text_encode.2
$region0: #{clip_text_encode.2}
  #allocation0 [shape = 'u32[]', space=smem, size = 0x4, offset = 0x4, fixed_abs, tag = 'smem constant byte address 0x4 - core index']
  #allocation1 [shape = 'u32[72,128]{1,0:T(1,128)}', space=vmem, size = 0x9000, scoped, tag = 'internal scratch']
  %s0 = inlined_call_operand.vmem [shape: f32[2,8,32], index: 0, kind: input, shape index: {}]
  %s1 = inlined_call_operand.vmem [shape: bf16[2,32,96], index: 1, kind: input, shape index: {}]
  %s2 = inlined_call_operand.vmem [shape: f32[2,1,96], index: 2, kind: input, shape index: {}]
  %s3 = inlined_call_operand.vmem [shape: bf16[2,32,32], index: 3, kind: input, shape index: {}]
  %s4 = inlined_call_operand.vmem [shape: f32[2,1,32], index: 4, kind: input, shape index: {}]
  %s5 = inlined_call_operand.vmem [shape: f32[2,1,32], index: 5, kind: input, shape index: {}]
  %s6 = inlined_call_operand.vmem [shape: f32[2,1,32], index: 6, kind: input, shape index: {}]
  %s7 = inlined_call_operand.vmem [shape: f32[2,1,32], index: 7, kind: input, shape index: {}]
  %s8 = inlined_call_operand.vmem [shape: f32[2,1,32], index: 8, kind: input, shape index: {}]
  %s9 = inlined_call_operand.vmem [shape: bf16[2,32,128], index: 9, kind: input, shape index: {}]
  %s10 = inlined_call_operand.vmem [shape: f32[2,1,128], index: 10, kind: input, shape index: {}]
  %s11 = inlined_call_operand.vmem [shape: bf16[2,128,32], index: 11, kind: input, shape index: {}]
  %s12 = inlined_call_operand.vmem [shape: f32[2,1,32], index: 12, kind: input, shape index: {}]
  %s13 = inlined_call_operand.vmem [shape: f32[2,8,32], index: 13, kind: output, shape index: {}]
  %s14 = sld [smem:[#allocation0]]
  $region89: #{clip_text_encode.2} parent=0
    _
  %s16 = ssub.s32 1, %s14
  %s17 = scalar_select 0, %s16, %s14
  loop: start=0, step=1, limit=6
  $region2: #{clip_text_encode.2} parent=0 // loop_pre_header
    _
  $region3: #{clip_text_encode.2} parent=0 // loop_header
    %s19 = sphi 0, %s23
    %p20 = scmp.ge.s32.totalorder %s19, 6
    %s26 = sphi 0, %s38
    %s27 = sphi 0, %s34
    %s28 = sphi 0, %s26
    %s29 = sphi 0, %s27
    %s30 = sphi 0, %s28
    %s31 = sphi 0, %s29
    %s41 = sphi 0, %s43
    %s44 = sphi 0, %s41
    %s45 = sphi 0, %s44
    %s61 = sphi 0, %s45
    %s67 = sphi 0, %s69
    %s70 = sphi 0, %s67
    %s71 = sphi 0, %s70
    %s87 = sphi 0, %s71
    %s93 = sphi 0, %s95
    %s96 = sphi 0, %s93
    %s97 = sphi 0, %s96
    %s113 = sphi 0, %s97
    %s119 = sphi 0, %s121
    %s122 = sphi 0, %s119
    %s123 = sphi 0, %s122
    %s139 = sphi 0, %s123
    %s145 = sphi 0, %s147
    %s148 = sphi 0, %s145
    %s149 = sphi 0, %s148
    %s165 = sphi 0, %s149
    %s171 = sphi 0, %s173
    %s174 = sphi 0, %s171
    %s175 = sphi 0, %s174
    %s191 = sphi 0, %s175
    %s197 = sphi 0, %s199
    %s200 = sphi 0, %s197
    %s201 = sphi 0, %s200
    %s217 = sphi 0, %s201
    %s223 = sphi 0, %s225
    %s226 = sphi 0, %s223
    %s227 = sphi 0, %s226
    %s243 = sphi 0, %s227
    %s249 = sphi 0, %s251
    %s252 = sphi 0, %s249
    %s253 = sphi 0, %s252
    %s269 = sphi 0, %s253
    %s275 = sphi 0, %s277
    %s278 = sphi 0, %s275
    %s279 = sphi 0, %s278
    %s295 = sphi 0, %s279
    %s301 = sphi 0, %s303
    %s304 = sphi 0, %s301
    %s305 = sphi 0, %s304
    %s321 = sphi 0, %s305
    %s327 = sphi 0, %s329
    %s330 = sphi 0, %s327
    %s331 = sphi 0, %s330
    %s347 = sphi 0, %s331
    %s353 = sphi 0, %s355
    %s356 = sphi 0, %s353
    %s357 = sphi 0, %s356
    %s373 = sphi 0, %s357
    %s379 = sphi 0, %s381
    %s382 = sphi 0, %s379
    %s383 = sphi 0, %s382
    %s399 = sphi 0, %s383
  $region4: #{clip_text_encode.2} parent=0 // loop_header_branch
    %22 = sbr.rel (%p20) target = $region8
  $region5: #{clip_text_encode.2} parent=0 // loop_body
    %s24 = ssub.s32 %s19, 1
    %s25 = ssub.s32 %s19, 2
    %s32 = sadd.s32 1, %s27
    %p33 = scmp.ge.s32.totalorder %s32, 2
    %s34 = scalar_select %p33, 0, %s32
    %s35 = sadd.s32 1, %s26
    %s36 = scalar_select %p33, %s35, %s26
    %p37 = scmp.ge.s32.totalorder %s36, 2
    %s38 = scalar_select %p37, 0, %s36
    %s39 = ssub.s32 %s26, %s38
    %p40 = scmp.eq.s32.totalorder %s39, 0
    %s42 = sadd.s32 %s41, 1
    %s43 = scalar_select %p40, %s41, %s42
    %p46 = pneg %p40
    %p47 = scmp.eq.s32.totalorder %s19, 3
    %p48 = por %p46, %p47
    %p49 = scmp.ne.s32.totalorder %s41, %s44
    %p50 = scmp.eq.s32.totalorder %s19, 0
    %p51 = por %p49, %p50
    %p52 = scmp.ne.s32.totalorder %s41, %s44
    %p53 = scmp.eq.s32.totalorder %s24, 3
    %p54 = por %p52, %p53
    %p55 = scmp.ne.s32.totalorder %s44, %s45
    %p56 = scmp.eq.s32.totalorder %s24, 0
    %p57 = por %p55, %p56
    %p58 = scmp.ne.s32.totalorder %s44, %s45
    %p59 = scmp.eq.s32.totalorder %s25, 3
    %p60 = por %p58, %p59
    %p62 = scmp.ne.s32.totalorder %s45, %s61
    %p63 = scmp.eq.s32.totalorder %s25, 0
    %p64 = por %p62, %p63
    %s65 = ssub.s32 %s27, %s34
    %p66 = scmp.eq.s32.totalorder %s65, 0
    %s68 = sadd.s32 %s67, 1
    %s69 = scalar_select %p66, %s67, %s68
    %p72 = pneg %p66
    %p73 = scmp.eq.s32.totalorder %s19, 3
    %p74 = por %p72, %p73
    %p75 = scmp.ne.s32.totalorder %s67, %s70
    %p76 = scmp.eq.s32.totalorder %s19, 0
    %p77 = por %p75, %p76
    %p78 = scmp.ne.s32.totalorder %s67, %s70
    %p79 = scmp.eq.s32.totalorder %s24, 3
    %p80 = por %p78, %p79
    %p81 = scmp.ne.s32.totalorder %s70, %s71
    %p82 = scmp.eq.s32.totalorder %s24, 0
    %p83 = por %p81, %p82
    %p84 = scmp.ne.s32.totalorder %s70, %s71
    %p85 = scmp.eq.s32.totalorder %s25, 3
    %p86 = por %p84, %p85
    %p88 = scmp.ne.s32.totalorder %s71, %s87
    %p89 = scmp.eq.s32.totalorder %s25, 0
    %p90 = por %p88, %p89
    %s91 = ssub.s32 %s27, %s34
    %p92 = scmp.eq.s32.totalorder %s91, 0
    %s94 = sadd.s32 %s93, 1
    %s95 = scalar_select %p92, %s93, %s94
    %p98 = pneg %p92
    %p99 = scmp.eq.s32.totalorder %s19, 3
    %p100 = por %p98, %p99
    %p101 = scmp.ne.s32.totalorder %s93, %s96
    %p102 = scmp.eq.s32.totalorder %s19, 0
    %p103 = por %p101, %p102
    %p104 = scmp.ne.s32.totalorder %s93, %s96
    %p105 = scmp.eq.s32.totalorder %s24, 3
    %p106 = por %p104, %p105
    %p107 = scmp.ne.s32.totalorder %s96, %s97
    %p108 = scmp.eq.s32.totalorder %s24, 0
    %p109 = por %p107, %p108
    %p110 = scmp.ne.s32.totalorder %s96, %s97
    %p111 = scmp.eq.s32.totalorder %s25, 3
    %p112 = por %p110, %p111
    %p114 = scmp.ne.s32.totalorder %s97, %s113
    %p115 = scmp.eq.s32.totalorder %s25, 0
    %p116 = por %p114, %p115
    %s117 = ssub.s32 %s27, %s34
    %p118 = scmp.eq.s32.totalorder %s117, 0
    %s120 = sadd.s32 %s119, 1
    %s121 = scalar_select %p118, %s119, %s120
    %p124 = pneg %p118
    %p125 = scmp.eq.s32.totalorder %s19, 3
    %p126 = por %p124, %p125
    %p127 = scmp.ne.s32.totalorder %s119, %s122
    %p128 = scmp.eq.s32.totalorder %s19, 0
    %p129 = por %p127, %p128
    %p130 = scmp.ne.s32.totalorder %s119, %s122
    %p131 = scmp.eq.s32.totalorder %s24, 3
    %p132 = por %p130, %p131
    %p133 = scmp.ne.s32.totalorder %s122, %s123
    %p134 = scmp.eq.s32.totalorder %s24, 0
    %p135 = por %p133, %p134
    %p136 = scmp.ne.s32.totalorder %s122, %s123
    %p137 = scmp.eq.s32.totalorder %s25, 3
    %p138 = por %p136, %p137
    %p140 = scmp.ne.s32.totalorder %s123, %s139
    %p141 = scmp.eq.s32.totalorder %s25, 0
    %p142 = por %p140, %p141
    %s143 = ssub.s32 %s27, %s34
    %p144 = scmp.eq.s32.totalorder %s143, 0
    %s146 = sadd.s32 %s145, 1
    %s147 = scalar_select %p144, %s145, %s146
    %p150 = pneg %p144
    %p151 = scmp.eq.s32.totalorder %s19, 3
    %p152 = por %p150, %p151
    %p153 = scmp.ne.s32.totalorder %s145, %s148
    %p154 = scmp.eq.s32.totalorder %s19, 0
    %p155 = por %p153, %p154
    %p156 = scmp.ne.s32.totalorder %s145, %s148
    %p157 = scmp.eq.s32.totalorder %s24, 3
    %p158 = por %p156, %p157
    %p159 = scmp.ne.s32.totalorder %s148, %s149
    %p160 = scmp.eq.s32.totalorder %s24, 0
    %p161 = por %p159, %p160
    %p162 = scmp.ne.s32.totalorder %s148, %s149
    %p163 = scmp.eq.s32.totalorder %s25, 3
    %p164 = por %p162, %p163
    %p166 = scmp.ne.s32.totalorder %s149, %s165
    %p167 = scmp.eq.s32.totalorder %s25, 0
    %p168 = por %p166, %p167
    %s169 = ssub.s32 %s27, %s34
    %p170 = scmp.eq.s32.totalorder %s169, 0
    %s172 = sadd.s32 %s171, 1
    %s173 = scalar_select %p170, %s171, %s172
    %p176 = pneg %p170
    %p177 = scmp.eq.s32.totalorder %s19, 3
    %p178 = por %p176, %p177
    %p179 = scmp.ne.s32.totalorder %s171, %s174
    %p180 = scmp.eq.s32.totalorder %s19, 0
    %p181 = por %p179, %p180
    %p182 = scmp.ne.s32.totalorder %s171, %s174
    %p183 = scmp.eq.s32.totalorder %s24, 3
    %p184 = por %p182, %p183
    %p185 = scmp.ne.s32.totalorder %s174, %s175
    %p186 = scmp.eq.s32.totalorder %s24, 0
    %p187 = por %p185, %p186
    %p188 = scmp.ne.s32.totalorder %s174, %s175
    %p189 = scmp.eq.s32.totalorder %s25, 3
    %p190 = por %p188, %p189
    %p192 = scmp.ne.s32.totalorder %s175, %s191
    %p193 = scmp.eq.s32.totalorder %s25, 0
    %p194 = por %p192, %p193
    %s195 = ssub.s32 %s27, %s34
    %p196 = scmp.eq.s32.totalorder %s195, 0
    %s198 = sadd.s32 %s197, 1
    %s199 = scalar_select %p196, %s197, %s198
    %p202 = pneg %p196
    %p203 = scmp.eq.s32.totalorder %s19, 3
    %p204 = por %p202, %p203
    %p205 = scmp.ne.s32.totalorder %s197, %s200
    %p206 = scmp.eq.s32.totalorder %s19, 0
    %p207 = por %p205, %p206
    %p208 = scmp.ne.s32.totalorder %s197, %s200
    %p209 = scmp.eq.s32.totalorder %s24, 3
    %p210 = por %p208, %p209
    %p211 = scmp.ne.s32.totalorder %s200, %s201
    %p212 = scmp.eq.s32.totalorder %s24, 0
    %p213 = por %p211, %p212
    %p214 = scmp.ne.s32.totalorder %s200, %s201
    %p215 = scmp.eq.s32.totalorder %s25, 3
    %p216 = por %p214, %p215
    %p218 = scmp.ne.s32.totalorder %s201, %s217
    %p219 = scmp.eq.s32.totalorder %s25, 0
    %p220 = por %p218, %p219
    %s221 = ssub.s32 %s27, %s34
    %p222 = scmp.eq.s32.totalorder %s221, 0
    %s224 = sadd.s32 %s223, 1
    %s225 = scalar_select %p222, %s223, %s224
    %p228 = pneg %p222
    %p229 = scmp.eq.s32.totalorder %s19, 3
    %p230 = por %p228, %p229
    %p231 = scmp.ne.s32.totalorder %s223, %s226
    %p232 = scmp.eq.s32.totalorder %s19, 0
    %p233 = por %p231, %p232
    %p234 = scmp.ne.s32.totalorder %s223, %s226
    %p235 = scmp.eq.s32.totalorder %s24, 3
    %p236 = por %p234, %p235
    %p237 = scmp.ne.s32.totalorder %s226, %s227
    %p238 = scmp.eq.s32.totalorder %s24, 0
    %p239 = por %p237, %p238
    %p240 = scmp.ne.s32.totalorder %s226, %s227
    %p241 = scmp.eq.s32.totalorder %s25, 3
    %p242 = por %p240, %p241
    %p244 = scmp.ne.s32.totalorder %s227, %s243
    %p245 = scmp.eq.s32.totalorder %s25, 0
    %p246 = por %p244, %p245
    %s247 = ssub.s32 %s27, %s34
    %p248 = scmp.eq.s32.totalorder %s247, 0
    %s250 = sadd.s32 %s249, 1
    %s251 = scalar_select %p248, %s249, %s250
    %p254 = pneg %p248
    %p255 = scmp.eq.s32.totalorder %s19, 3
    %p256 = por %p254, %p255
    %p257 = scmp.ne.s32.totalorder %s249, %s252
    %p258 = scmp.eq.s32.totalorder %s19, 0
    %p259 = por %p257, %p258
    %p260 = scmp.ne.s32.totalorder %s249, %s252
    %p261 = scmp.eq.s32.totalorder %s24, 3
    %p262 = por %p260, %p261
    %p263 = scmp.ne.s32.totalorder %s252, %s253
    %p264 = scmp.eq.s32.totalorder %s24, 0
    %p265 = por %p263, %p264
    %p266 = scmp.ne.s32.totalorder %s252, %s253
    %p267 = scmp.eq.s32.totalorder %s25, 3
    %p268 = por %p266, %p267
    %p270 = scmp.ne.s32.totalorder %s253, %s269
    %p271 = scmp.eq.s32.totalorder %s25, 0
    %p272 = por %p270, %p271
    %s273 = ssub.s32 %s27, %s34
    %p274 = scmp.eq.s32.totalorder %s273, 0
    %s276 = sadd.s32 %s275, 1
    %s277 = scalar_select %p274, %s275, %s276
    %p280 = pneg %p274
    %p281 = scmp.eq.s32.totalorder %s19, 3
    %p282 = por %p280, %p281
    %p283 = scmp.ne.s32.totalorder %s275, %s278
    %p284 = scmp.eq.s32.totalorder %s19, 0
    %p285 = por %p283, %p284
    %p286 = scmp.ne.s32.totalorder %s275, %s278
    %p287 = scmp.eq.s32.totalorder %s24, 3
    %p288 = por %p286, %p287
    %p289 = scmp.ne.s32.totalorder %s278, %s279
    %p290 = scmp.eq.s32.totalorder %s24, 0
    %p291 = por %p289, %p290
    %p292 = scmp.ne.s32.totalorder %s278, %s279
    %p293 = scmp.eq.s32.totalorder %s25, 3
    %p294 = por %p292, %p293
    %p296 = scmp.ne.s32.totalorder %s279, %s295
    %p297 = scmp.eq.s32.totalorder %s25, 0
    %p298 = por %p296, %p297
    %s299 = ssub.s32 %s27, %s34
    %p300 = scmp.eq.s32.totalorder %s299, 0
    %s302 = sadd.s32 %s301, 1
    %s303 = scalar_select %p300, %s301, %s302
    %p306 = pneg %p300
    %p307 = scmp.eq.s32.totalorder %s19, 3
    %p308 = por %p306, %p307
    %p309 = scmp.ne.s32.totalorder %s301, %s304
    %p310 = scmp.eq.s32.totalorder %s19, 0
    %p311 = por %p309, %p310
    %p312 = scmp.ne.s32.totalorder %s301, %s304
    %p313 = scmp.eq.s32.totalorder %s24, 3
    %p314 = por %p312, %p313
    %p315 = scmp.ne.s32.totalorder %s304, %s305
    %p316 = scmp.eq.s32.totalorder %s24, 0
    %p317 = por %p315, %p316
    %p318 = scmp.ne.s32.totalorder %s304, %s305
    %p319 = scmp.eq.s32.totalorder %s25, 3
    %p320 = por %p318, %p319
    %p322 = scmp.ne.s32.totalorder %s305, %s321
    %p323 = scmp.eq.s32.totalorder %s25, 0
    %p324 = por %p322, %p323
    %s325 = ssub.s32 %s27, %s34
    %p326 = scmp.eq.s32.totalorder %s325, 0
    %s328 = sadd.s32 %s327, 1
    %s329 = scalar_select %p326, %s327, %s328
    %p332 = pneg %p326
    %p333 = scmp.eq.s32.totalorder %s19, 3
    %p334 = por %p332, %p333
    %p335 = scmp.ne.s32.totalorder %s327, %s330
    %p336 = scmp.eq.s32.totalorder %s19, 0
    %p337 = por %p335, %p336
    %p338 = scmp.ne.s32.totalorder %s327, %s330
    %p339 = scmp.eq.s32.totalorder %s24, 3
    %p340 = por %p338, %p339
    %p341 = scmp.ne.s32.totalorder %s330, %s331
    %p342 = scmp.eq.s32.totalorder %s24, 0
    %p343 = por %p341, %p342
    %p344 = scmp.ne.s32.totalorder %s330, %s331
    %p345 = scmp.eq.s32.totalorder %s25, 3
    %p346 = por %p344, %p345
    %p348 = scmp.ne.s32.totalorder %s331, %s347
    %p349 = scmp.eq.s32.totalorder %s25, 0
    %p350 = por %p348, %p349
    %s351 = ssub.s32 %s27, %s34
    %p352 = scmp.eq.s32.totalorder %s351, 0
    %s354 = sadd.s32 %s353, 1
    %s355 = scalar_select %p352, %s353, %s354
    %p358 = pneg %p352
    %p359 = scmp.eq.s32.totalorder %s19, 3
    %p360 = por %p358, %p359
    %p361 = scmp.ne.s32.totalorder %s353, %s356
    %p362 = scmp.eq.s32.totalorder %s19, 0
    %p363 = por %p361, %p362
    %p364 = scmp.ne.s32.totalorder %s353, %s356
    %p365 = scmp.eq.s32.totalorder %s24, 3
    %p366 = por %p364, %p365
    %p367 = scmp.ne.s32.totalorder %s356, %s357
    %p368 = scmp.eq.s32.totalorder %s24, 0
    %p369 = por %p367, %p368
    %p370 = scmp.ne.s32.totalorder %s356, %s357
    %p371 = scmp.eq.s32.totalorder %s25, 3
    %p372 = por %p370, %p371
    %p374 = scmp.ne.s32.totalorder %s357, %s373
    %p375 = scmp.eq.s32.totalorder %s25, 0
    %p376 = por %p374, %p375
    %s377 = ssub.s32 %s26, %s38
    %p378 = scmp.eq.s32.totalorder %s377, 0
    %s380 = sadd.s32 %s379, 1
    %s381 = scalar_select %p378, %s379, %s380
    %p384 = pneg %p378
    %p385 = scmp.eq.s32.totalorder %s19, 3
    %p386 = por %p384, %p385
    %p387 = scmp.ne.s32.totalorder %s379, %s382
    %p388 = scmp.eq.s32.totalorder %s19, 0
    %p389 = por %p387, %p388
    %p390 = scmp.ne.s32.totalorder %s379, %s382
    %p391 = scmp.eq.s32.totalorder %s24, 3
    %p392 = por %p390, %p391
    %p393 = scmp.ne.s32.totalorder %s382, %s383
    %p394 = scmp.eq.s32.totalorder %s24, 0
    %p395 = por %p393, %p394
    %p396 = scmp.ne.s32.totalorder %s382, %s383
    %p397 = scmp.eq.s32.totalorder %s25, 3
    %p398 = por %p396, %p397
    %p400 = scmp.ne.s32.totalorder %s383, %s399
    %p401 = scmp.eq.s32.totalorder %s25, 0
    %p402 = por %p400, %p401
    %p403 = scmp.le.s32.totalorder 1, %s19
    %p404 = scmp.lt.s32.totalorder %s19, 5
    %p405 = pnand %p403, %p404
    %p406 = pneg %p405
    // Predicated region
    $region9: #{clip_text_encode.2} parent=5 // pred_check
      _
    $region10: #{clip_text_encode.2} parent=5 // pred_check_branch
      %408 = sbr.rel (%p405) target = $region12
    $region11: #{clip_text_encode.2} parent=5 // pred_region
      %s409 = ssub.s32 %s19, 1
    $region12: #{clip_text_encode.2} parent=5 // pred_fallthru
      _
    %p410 = scmp.lt.s32.totalorder %s19, 4
    // Predicated region
    $region13: #{clip_text_encode.2} parent=5 // pred_check
      %p411 = pneg %p410
    $region14: #{clip_text_encode.2} parent=5 // pred_check_branch
      %413 = sbr.rel (%p411) target = $region16
    $region15: #{clip_text_encode.2} parent=5 // pred_region
      // Predicated region
      $region17: #{clip_text_encode.2} parent=15 // pred_check
        %p414 = pneg %p51
      $region18: #{clip_text_encode.2} parent=15 // pred_check_branch
        %416 = sbr.rel (%p414) target = $region20
      $region19: #{clip_text_encode.2} parent=15 // pred_region
        %p417 = scmp.lt.s32.totalorder %s26, 1
        %s418 = scalar_select %p417, %s26, 1
        %s419 = smul.addr %s418, 8
        %s420 = scalar_lea.vmem %s0, %s419
      $region20: #{clip_text_encode.2} parent=15 // pred_fallthru
        _
      // Predicated region
      $region21: #{clip_text_encode.2} parent=15 // pred_check
        %p421 = pneg %p77
      $region22: #{clip_text_encode.2} parent=15 // pred_check_branch
        %423 = sbr.rel (%p421) target = $region24
      $region23: #{clip_text_encode.2} parent=15 // pred_region
        %p424 = scmp.lt.s32.totalorder %s27, 1
        %s425 = scalar_select %p424, %s27, 1
        %s426 = smul.addr %s425, 4
        %s427 = smul.addr %s426, 4
        %s428 = scalar_lea.vmem %s1, %s427
      $region24: #{clip_text_encode.2} parent=15 // pred_fallthru
        _
      // Predicated region
      $region25: #{clip_text_encode.2} parent=15 // pred_check
        %p429 = pneg %p103
      $region26: #{clip_text_encode.2} parent=15 // pred_check_branch
        %431 = sbr.rel (%p429) target = $region28
      $region27: #{clip_text_encode.2} parent=15 // pred_region
        %p432 = scmp.lt.s32.totalorder %s27, 1
        %s433 = scalar_select %p432, %s27, 1
        %s434 = scalar_lea.vmem %s2, %s433
      $region28: #{clip_text_encode.2} parent=15 // pred_fallthru
        _
      // Predicated region
      $region29: #{clip_text_encode.2} parent=15 // pred_check
        %p435 = pneg %p129
      $region30: #{clip_text_encode.2} parent=15 // pred_check_branch
        %437 = sbr.rel (%p435) target = $region32
      $region31: #{clip_text_encode.2} parent=15 // pred_region
        %p438 = scmp.lt.s32.totalorder %s27, 1
        %s439 = scalar_select %p438, %s27, 1
        %s440 = smul.addr %s439, 4
        %s441 = smul.addr %s440, 4
        %s442 = scalar_lea.vmem %s3, %s441
      $region32: #{clip_text_encode.2} parent=15 // pred_fallthru
        _
      // Predicated region
      $region33: #{clip_text_encode.2} parent=15 // pred_check
        %p443 = pneg %p155
      $region34: #{clip_text_encode.2} parent=15 // pred_check_branch
        %445 = sbr.rel (%p443) target = $region36
      $region35: #{clip_text_encode.2} parent=15 // pred_region
        %p446 = scmp.lt.s32.totalorder %s27, 1
        %s447 = scalar_select %p446, %s27, 1
        %s448 = scalar_lea.vmem %s4, %s447
      $region36: #{clip_text_encode.2} parent=15 // pred_fallthru
        _
      // Predicated region
      $region37: #{clip_text_encode.2} parent=15 // pred_check
        %p449 = pneg %p181
      $region38: #{clip_text_encode.2} parent=15 // pred_check_branch
        %451 = sbr.rel (%p449) target = $region40
      $region39: #{clip_text_encode.2} parent=15 // pred_region
        %p452 = scmp.lt.s32.totalorder %s27, 1
        %s453 = scalar_select %p452, %s27, 1
        %s454 = scalar_lea.vmem %s5, %s453
      $region40: #{clip_text_encode.2} parent=15 // pred_fallthru
        _
      // Predicated region
      $region41: #{clip_text_encode.2} parent=15 // pred_check
        %p455 = pneg %p207
      $region42: #{clip_text_encode.2} parent=15 // pred_check_branch
        %457 = sbr.rel (%p455) target = $region44
      $region43: #{clip_text_encode.2} parent=15 // pred_region
        %p458 = scmp.lt.s32.totalorder %s27, 1
        %s459 = scalar_select %p458, %s27, 1
        %s460 = scalar_lea.vmem %s6, %s459
      $region44: #{clip_text_encode.2} parent=15 // pred_fallthru
        _
      // Predicated region
      $region45: #{clip_text_encode.2} parent=15 // pred_check
        %p461 = pneg %p233
      $region46: #{clip_text_encode.2} parent=15 // pred_check_branch
        %463 = sbr.rel (%p461) target = $region48
      $region47: #{clip_text_encode.2} parent=15 // pred_region
        %p464 = scmp.lt.s32.totalorder %s27, 1
        %s465 = scalar_select %p464, %s27, 1
        %s466 = scalar_lea.vmem %s7, %s465
      $region48: #{clip_text_encode.2} parent=15 // pred_fallthru
        _
      // Predicated region
      $region49: #{clip_text_encode.2} parent=15 // pred_check
        %p467 = pneg %p259
      $region50: #{clip_text_encode.2} parent=15 // pred_check_branch
        %469 = sbr.rel (%p467) target = $region52
      $region51: #{clip_text_encode.2} parent=15 // pred_region
        %p470 = scmp.lt.s32.totalorder %s27, 1
        %s471 = scalar_select %p470, %s27, 1
        %s472 = scalar_lea.vmem %s8, %s471
      $region52: #{clip_text_encode.2} parent=15 // pred_fallthru
        _
      // Predicated region
      $region53: #{clip_text_encode.2} parent=15 // pred_check
        %p473 = pneg %p285
      $region54: #{clip_text_encode.2} parent=15 // pred_check_branch
        %475 = sbr.rel (%p473) target = $region56
      $region55: #{clip_text_encode.2} parent=15 // pred_region
        %p476 = scmp.lt.s32.totalorder %s27, 1
        %s477 = scalar_select %p476, %s27, 1
        %s478 = smul.addr %s477, 4
        %s479 = smul.addr %s478, 4
        %s480 = scalar_lea.vmem %s9, %s479
      $region56: #{clip_text_encode.2} parent=15 // pred_fallthru
        _
      // Predicated region
      $region57: #{clip_text_encode.2} parent=15 // pred_check
        %p481 = pneg %p311
      $region58: #{clip_text_encode.2} parent=15 // pred_check_branch
        %483 = sbr.rel (%p481) target = $region60
      $region59: #{clip_text_encode.2} parent=15 // pred_region
        %p484 = scmp.lt.s32.totalorder %s27, 1
        %s485 = scalar_select %p484, %s27, 1
        %s486 = scalar_lea.vmem %s10, %s485
      $region60: #{clip_text_encode.2} parent=15 // pred_fallthru
        _
      // Predicated region
      $region61: #{clip_text_encode.2} parent=15 // pred_check
        %p487 = pneg %p337
      $region62: #{clip_text_encode.2} parent=15 // pred_check_branch
        %489 = sbr.rel (%p487) target = $region64
      $region63: #{clip_text_encode.2} parent=15 // pred_region
        %p490 = scmp.lt.s32.totalorder %s27, 1
        %s491 = scalar_select %p490, %s27, 1
        %s492 = smul.addr %s491, 16
        %s493 = smul.addr %s492, 4
        %s494 = scalar_lea.vmem %s11, %s493
      $region64: #{clip_text_encode.2} parent=15 // pred_fallthru
        _
      // Predicated region
      $region65: #{clip_text_encode.2} parent=15 // pred_check
        %p495 = pneg %p363
      $region66: #{clip_text_encode.2} parent=15 // pred_check_branch
        %497 = sbr.rel (%p495) target = $region68
      $region67: #{clip_text_encode.2} parent=15 // pred_region
        %p498 = scmp.lt.s32.totalorder %s27, 1
        %s499 = scalar_select %p498, %s27, 1
        %s500 = scalar_lea.vmem %s12, %s499
      $region68: #{clip_text_encode.2} parent=15 // pred_fallthru
        _
    $region16: #{clip_text_encode.2} parent=5 // pred_fallthru
      _
    %p501 = scmp.le.s32.totalorder 1, %s19
    %p502 = scmp.lt.s32.totalorder %s19, 5
    %p503 = pnand %p501, %p502
    %p504 = pneg %p503
    // Predicated region
    $region69: #{clip_text_encode.2} parent=5 // pred_check
      _
    $region70: #{clip_text_encode.2} parent=5 // pred_check_branch
      %506 = sbr.rel (%p503) target = $region72
    $region71: #{clip_text_encode.2} parent=5 // pred_region
      %s507 = ssub.s32 %s19, 1
      %p508 = scmp.lt.s32.totalorder %s28, 1
      %s509 = scalar_select %p508, %s28, 1
      %s510 = smul.addr %s509, 8
      %s511 = scalar_lea.vmem %s0, %s510
      %p512 = pneg %p57
      %p513 = pneg %p54
      %p514 = scmp.lt.s32.totalorder %s29, 1
      %s515 = scalar_select %p514, %s29, 1
      %s516 = smul.addr %s515, 4
      %s517 = smul.addr %s516, 4
      %s518 = scalar_lea.vmem %s1, %s517
      %p519 = pneg %p83
      %p520 = pneg %p80
      %p521 = scmp.lt.s32.totalorder %s29, 1
      %s522 = scalar_select %p521, %s29, 1
      %s523 = scalar_lea.vmem %s2, %s522
      %p524 = pneg %p109
      %p525 = pneg %p106
      %p526 = scmp.lt.s32.totalorder %s29, 1
      %s527 = scalar_select %p526, %s29, 1
      %s528 = smul.addr %s527, 4
      %s529 = smul.addr %s528, 4
      %s530 = scalar_lea.vmem %s3, %s529
      %p531 = pneg %p135
      %p532 = pneg %p132
      %p533 = scmp.lt.s32.totalorder %s29, 1
      %s534 = scalar_select %p533, %s29, 1
      %s535 = scalar_lea.vmem %s4, %s534
      %p536 = pneg %p161
      %p537 = pneg %p158
      %p538 = scmp.lt.s32.totalorder %s29, 1
      %s539 = scalar_select %p538, %s29, 1
      %s540 = scalar_lea.vmem %s5, %s539
      %p541 = pneg %p187
      %p542 = pneg %p184
      %p543 = scmp.lt.s32.totalorder %s29, 1
      %s544 = scalar_select %p543, %s29, 1
      %s545 = scalar_lea.vmem %s6, %s544
      %p546 = pneg %p213
      %p547 = pneg %p210
      %p548 = scmp.lt.s32.totalorder %s29, 1
      %s549 = scalar_select %p548, %s29, 1
      %s550 = scalar_lea.vmem %s7, %s549
      %p551 = pneg %p239
      %p552 = pneg %p236
      %p553 = scmp.lt.s32.totalorder %s29, 1
      %s554 = scalar_select %p553, %s29, 1
      %s555 = scalar_lea.vmem %s8, %s554
      %p556 = pneg %p265
      %p557 = pneg %p262
      %p558 = scmp.lt.s32.totalorder %s29, 1
      %s559 = scalar_select %p558, %s29, 1
      %s560 = smul.addr %s559, 4
      %s561 = smul.addr %s560, 4
      %s562 = scalar_lea.vmem %s9, %s561
      %p563 = pneg %p291
      %p564 = pneg %p288
      %p565 = scmp.lt.s32.totalorder %s29, 1
      %s566 = scalar_select %p565, %s29, 1
      %s567 = scalar_lea.vmem %s10, %s566
      %p568 = pneg %p317
      %p569 = pneg %p314
      %p570 = scmp.lt.s32.totalorder %s29, 1
      %s571 = scalar_select %p570, %s29, 1
      %s572 = smul.addr %s571, 16
      %s573 = smul.addr %s572, 4
      %s574 = scalar_lea.vmem %s11, %s573
      %p575 = pneg %p343
      %p576 = pneg %p340
      %p577 = scmp.lt.s32.totalorder %s29, 1
      %s578 = scalar_select %p577, %s29, 1
      %s579 = scalar_lea.vmem %s12, %s578
      %p580 = pneg %p369
      %p581 = pneg %p366
      %p582 = pneg %p395
      %p583 = pneg %p392
      %p584 = scmp.lt.s32.totalorder %s28, 1
      %s585 = scalar_select %p584, %s28, 1
      %s586 = smul.addr %s585, 8
      %s587 = scalar_lea.vmem %s13, %s586
      %p588 = scmp.lt.s32.totalorder %s28, 1
      %s589 = scalar_select %p588, %s28, 1
      %s590 = smul.addr %s589, 8
      %s591 = scalar_lea.vmem %s0, %s590
      %p592 = scmp.lt.s32.totalorder %s29, 1
      %s593 = scalar_select %p592, %s29, 1
      %s594 = smul.addr %s593, 4
      %s595 = smul.addr %s594, 4
      %s596 = scalar_lea.vmem %s1, %s595
      %p597 = scmp.lt.s32.totalorder %s29, 1
      %s598 = scalar_select %p597, %s29, 1
      %s599 = scalar_lea.vmem %s2, %s598
      %p600 = scmp.lt.s32.totalorder %s29, 1
      %s601 = scalar_select %p600, %s29, 1
      %s602 = smul.addr %s601, 4
      %s603 = smul.addr %s602, 4
      %s604 = scalar_lea.vmem %s3, %s603
      %p605 = scmp.lt.s32.totalorder %s29, 1
      %s606 = scalar_select %p605, %s29, 1
      %s607 = scalar_lea.vmem %s4, %s606
      %p608 = scmp.lt.s32.totalorder %s29, 1
      %s609 = scalar_select %p608, %s29, 1
      %s610 = scalar_lea.vmem %s5, %s609
      %p611 = scmp.lt.s32.totalorder %s29, 1
      %s612 = scalar_select %p611, %s29, 1
      %s613 = scalar_lea.vmem %s6, %s612
      %p614 = scmp.lt.s32.totalorder %s29, 1
      %s615 = scalar_select %p614, %s29, 1
      %s616 = scalar_lea.vmem %s7, %s615
      %p617 = scmp.lt.s32.totalorder %s29, 1
      %s618 = scalar_select %p617, %s29, 1
      %s619 = scalar_lea.vmem %s8, %s618
      %p620 = scmp.lt.s32.totalorder %s29, 1
      %s621 = scalar_select %p620, %s29, 1
      %s622 = smul.addr %s621, 4
      %s623 = smul.addr %s622, 4
      %s624 = scalar_lea.vmem %s9, %s623
      %p625 = scmp.lt.s32.totalorder %s29, 1
      %s626 = scalar_select %p625, %s29, 1
      %s627 = scalar_lea.vmem %s10, %s626
      %p628 = scmp.lt.s32.totalorder %s29, 1
      %s629 = scalar_select %p628, %s29, 1
      %s630 = smul.addr %s629, 16
      %s631 = smul.addr %s630, 4
      %s632 = scalar_lea.vmem %s11, %s631
      %p633 = scmp.lt.s32.totalorder %s29, 1
      %s634 = scalar_select %p633, %s29, 1
      %s635 = scalar_lea.vmem %s12, %s634
      %p636 = scmp.lt.s32.totalorder %s28, 1
      %s637 = scalar_select %p636, %s28, 1
      %s638 = smul.addr %s637, 8
      %s639 = scalar_lea.vmem %s13, %s638
      %p641 = scmp.eq.s32.totalorder %s29, 0
      // Predicated region
      $region73: #{clip_text_encode.2} parent=71 // pred_check
        %p642 = pneg %p641
      $region74: #{clip_text_encode.2} parent=71 // pred_check_branch
        %644 = sbr.rel (%p642) target = $region76
      $region75: #{clip_text_encode.2} parent=71 // pred_region
        %v645 = vld [vmem:[%s591] sm:$0xff]
        %vm646 = vcmask 261120
        %647 = vst.msk [vmem:[%s639] sm:$0xff] %vm646, %v645
      $region76: #{clip_text_encode.2} parent=71 // pred_fallthru
        _
      %v648 = vld [vmem:[%s639] sm:$0xff]
      %v649 = vld [vmem:[%s610] sm:$0x1]
      %v650 = vld [vmem:[%s613] sm:$0x1]
      %vm651 = vcmask 261120
      %v652 = vsel %vm651, %v648, 0.0
      %653 = vadd.xlane.f32.xlu0 %v652
      %v654 = vpop.xlane.xlu0 %653
      %v655 = vrcp.pop 32.0
      %v656 = vmul.f32 32.0, %v655
      %v657 = vsub.f32 1.0, %v656
      %v658 = vmul.f32 %v655, %v657
      %v659 = vadd.f32 %v655, %v658
      %vm660 = vweird.f32 %v655
      %v661 = vsel %vm660, %v655, %v659
      %v662 = vmul.f32 %v654, %v661
      %v663 = vsub.f32 %v648, %v662
      %v664 = vmul.f32 %v663, %v663
      %v665 = vsel %vm651, %v664, 0.0
      %666 = vadd.xlane.f32.xlu0 %v665
      %v667 = vpop.xlane.xlu0 %666
      %v668 = vmul.f32 %v667, %v661
      %v669 = vadd.f32 %v668, 1e-05
      %v670 = vrsqrt.pop %v669
      %v671 = vmul.f32 %v670, %v669
      %v672 = vmul.f32 %v671, %v670
      %v673 = vmul.f32 0.5, %v672
      %v674 = vsub.f32 1.5, %v673
      %v675 = vmul.f32 %v670, %v674
      %vm676 = vweird.f32 %v669
      %vm677 = vweird.f32 %v670
      %vm678 = vmor %vm676, %vm677
      %v679 = vsel %vm678, %v670, %v675
      %v680 = vmul.f32 %v663, %v679
      %v682 = vperm.slane %v649, 0
      %v684 = vmul.f32 %v680, %v682
      %v686 = vperm.slane %v650, 0
      %v688 = vadd.f32 %v684, %v686
      %v689 = vpack.c.bf16 %v688, %v688
      %v690 = vld [vmem:[%s596] sm:$0xf]
      %v691 = vld [vmem:[%s596 + $0x4] sm:$0xf]
      %v692 = vld [vmem:[%s596 + $0x8] sm:$0xf]
      %v693 = vld [vmem:[%s596 + $0xc] sm:$0xf]
      %v694 = vld [vmem:[%s599] sm:$0x1]
      %v696 = vperm.slane %v694, 0
      %v702 = vunpack.c.l.b16 %v690
      %v703 = vunpack.c.l.b16 %v691
      %v704 = vunpack.c.l.b16 %v692
      %v705 = vunpack.c.l.b16 %v693
      %v706 = vpack.c.b16 %v703, %v702
      %v707 = vpack.c.b16 %v705, %v704
      %v711 = vsel %vm651, %v689, 0
      %713 = vmatpush.bf16.msra.mxu0 0
      %714 = vmatpush.bf16.msra.mxu0 0
      %715 = vmatpush.bf16.msra.mxu0 0
      %716 = vmatpush.bf16.msra.mxu0 0
      %717 = vmatpush.bf16.msra.mxu0 0
      %718 = vmatpush.bf16.msra.mxu0 0
      %719 = vmatpush.bf16.msra.mxu0 %v707
      %720 = vmatpush.bf16.msra.mxu0 %v706
      %721 = vmatmul.bf16.gmra.mxu0 %v711
      %v722 = vpop.f32.mrf.mxu0
      %v723 = vadd.f32 %v696, %v722
      %v724 = vpop.f32.mrf.mxu0
      %725 = vdwg.mxu0
      %v726 = vlaneseq
      %v727 = vshrl.u32 %v726, 7
      %v728 = vlaneseq
      %v729 = vand.u32 %v728, 127
      %vm730 = vcmp.gt.s32.totalorder %v729, %v727
      %v731 = vsel %vm730, -1e+30, 0.0
      %v732 = vmul.f32 %v723, 0.35355338
      %v733 = vpack.c.bf16 %v732, %v732
      %v734 = vpack.c.bf16 %v723, %v723
      %v736 = vunpack.c.l.b16 %v734
      %v737 = vpack.c.b16 %v736, %v736
      %738 = vrot.lane.b32.xlu0 %v737, 96
      %v739 = vpop.permute.xlu0 %738
      %vm740 = vcmask 64512
      %v742 = vsel %vm740, %v733, 0
      %v745 = vsel %vm740, %v739, 0
      %747 = vmatpush.bf16.xpose.msra.mxu0 0
      %748 = vmatpush.bf16.xpose.msra.mxu0 0
      %749 = vmatpush.bf16.xpose.msra.mxu0 0
      %750 = vmatpush.bf16.xpose.msra.mxu0 0
      %751 = vmatpush.bf16.xpose.msra.mxu0 0
      %752 = vmatpush.bf16.xpose.msra.mxu0 0
      %753 = vmatpush.bf16.xpose.msra.mxu0 0
      %754 = vmatpush.bf16.xpose.msra.mxu0 %v745
      %755 = vmatmul.bf16.gmra.mxu0 %v742
      %v756 = vpop.f32.mrf.mxu0
      %v757 = vadd.f32 %v731, %v756
      %v758 = vpop.f32.mrf.mxu0
      %759 = vdwg.mxu0
      %v760 = vsel %vm740, %v757, -inf
      %761 = vmax.xlane.f32.xlu0 %v760
      %v762 = vpop.xlane.xlu0 %761
      %v763 = vsub.f32 %v757, %v762
      %v764 = vmul.f32 %v763, 1.442695
      %v765 = vpow.pop %v764
      %v766 = vsel %vm740, %v765, 0.0
      %767 = vadd.xlane.f32.xlu0 %v766
      %v768 = vpop.xlane.xlu0 %767
      %v769 = vrcp.pop %v768
      %v770 = vmul.f32 %v765, %v769
      %v771 = vpack.c.bf16 %v770, %v770
      %772 = vrot.lane.b32.xlu0 %v737, 64
      %v773 = vpop.permute.xlu0 %772
      %v775 = vsel %vm740, %v771, 0
      %vm777 = vcmask 1043456
      %v779 = vsel %vm777, %v773, 0
      %781 = vmatpush.bf16.msra.mxu0 0
      %782 = vmatpush.bf16.msra.mxu0 0
      %783 = vmatpush.bf16.msra.mxu0 0
      %784 = vmatpush.bf16.msra.mxu0 0
      %785 = vmatpush.bf16.msra.mxu0 0
      %786 = vmatpush.bf16.msra.mxu0 0
      %787 = vmatpush.bf16.msra.mxu0 0
      %788 = vmatpush.bf16.msra.mxu0 %v779
      %789 = vmatmul.bf16.gmra.mxu0 %v775
      %v790 = vpop.f32.mrf.mxu0
      %v791 = vadd.f32 0.0, %v790
      %v792 = vpop.f32.mrf.mxu0
      %793 = vdwg.mxu0
      %v795 = vunpack.c.l.b16 %v733
      %v796 = vpack.c.b16 %v795, %v795
      %797 = vrot.lane.b32.xlu0 %v796, 120
      %v798 = vpop.permute.xlu0 %797
      %799 = vrot.lane.b32.xlu0 %v737, 88
      %v800 = vpop.permute.xlu0 %799
      %v802 = vsel %vm740, %v798, 0
      %v805 = vsel %vm740, %v800, 0
      %807 = vmatpush.bf16.xpose.msra.mxu0 0
      %808 = vmatpush.bf16.xpose.msra.mxu0 0
      %809 = vmatpush.bf16.xpose.msra.mxu0 0
      %810 = vmatpush.bf16.xpose.msra.mxu0 0
      %811 = vmatpush.bf16.xpose.msra.mxu0 0
      %812 = vmatpush.bf16.xpose.msra.mxu0 0
      %813 = vmatpush.bf16.xpose.msra.mxu0 0
      %814 = vmatpush.bf16.xpose.msra.mxu0 %v805
      %815 = vmatmul.bf16.gmra.mxu0 %v802
      %v816 = vpop.f32.mrf.mxu0
      %v817 = vadd.f32 %v731, %v816
      %v818 = vpop.f32.mrf.mxu0
      %819 = vdwg.mxu0
      %v820 = vsel %vm740, %v817, -inf
      %821 = vmax.xlane.f32.xlu0 %v820
      %v822 = vpop.xlane.xlu0 %821
      %v823 = vsub.f32 %v817, %v822
      %v824 = vmul.f32 %v823, 1.442695
      %v825 = vpow.pop %v824
      %v826 = vsel %vm740, %v825, 0.0
      %827 = vadd.xlane.f32.xlu0 %v826
      %v828 = vpop.xlane.xlu0 %827
      %v829 = vrcp.pop %v828
      %v830 = vmul.f32 %v825, %v829
      %v831 = vpack.c.bf16 %v830, %v830
      %832 = vrot.lane.b32.xlu0 %v737, 56
      %v833 = vpop.permute.xlu0 %832
      %v835 = vsel %vm740, %v831, 0
      %v838 = vsel %vm777, %v833, 0
      %840 = vmatpush.bf16.msra.mxu0 0
      %841 = vmatpush.bf16.msra.mxu0 0
      %842 = vmatpush.bf16.msra.mxu0 0
      %843 = vmatpush.bf16.msra.mxu0 0
      %844 = vmatpush.bf16.msra.mxu0 0
      %845 = vmatpush.bf16.msra.mxu0 0
      %846 = vmatpush.bf16.msra.mxu0 0
      %847 = vmatpush.bf16.msra.mxu0 %v838
      %848 = vmatmul.bf16.gmra.mxu0 %v835
      %v849 = vpop.f32.mrf.mxu0
      %v850 = vadd.f32 0.0, %v849
      %v851 = vpop.f32.mrf.mxu0
      %852 = vdwg.mxu0
      %853 = vrot.lane.b32.xlu0 %v796, 112
      %v854 = vpop.permute.xlu0 %853
      %855 = vrot.lane.b32.xlu0 %v737, 80
      %v856 = vpop.permute.xlu0 %855
      %v858 = vsel %vm740, %v854, 0
      %v861 = vsel %vm740, %v856, 0
      %863 = vmatpush.bf16.xpose.msra.mxu0 0
      %864 = vmatpush.bf16.xpose.msra.mxu0 0
      %865 = vmatpush.bf16.xpose.msra.mxu0 0
      %866 = vmatpush.bf16.xpose.msra.mxu0 0
      %867 = vmatpush.bf16.xpose.msra.mxu0 0
      %868 = vmatpush.bf16.xpose.msra.mxu0 0
      %869 = vmatpush.bf16.xpose.msra.mxu0 0
      %870 = vmatpush.bf16.xpose.msra.mxu0 %v861
      %871 = vmatmul.bf16.gmra.mxu0 %v858
      %v872 = vpop.f32.mrf.mxu0
      %v873 = vadd.f32 %v731, %v872
      %v874 = vpop.f32.mrf.mxu0
      %875 = vdwg.mxu0
      %v876 = vsel %vm740, %v873, -inf
      %877 = vmax.xlane.f32.xlu0 %v876
      %v878 = vpop.xlane.xlu0 %877
      %v879 = vsub.f32 %v873, %v878
      %v880 = vmul.f32 %v879, 1.442695
      %v881 = vpow.pop %v880
      %v882 = vsel %vm740, %v881, 0.0
      %883 = vadd.xlane.f32.xlu0 %v882
      %v884 = vpop.xlane.xlu0 %883
      %v885 = vrcp.pop %v884
      %v886 = vmul.f32 %v881, %v885
      %v887 = vpack.c.bf16 %v886, %v886
      %888 = vrot.lane.b32.xlu0 %v737, 48
      %v889 = vpop.permute.xlu0 %888
      %v891 = vsel %vm740, %v887, 0
      %v894 = vsel %vm777, %v889, 0
      %896 = vmatpush.bf16.msra.mxu0 0
      %897 = vmatpush.bf16.msra.mxu0 0
      %898 = vmatpush.bf16.msra.mxu0 0
      %899 = vmatpush.bf16.msra.mxu0 0
      %900 = vmatpush.bf16.msra.mxu0 0
      %901 = vmatpush.bf16.msra.mxu0 0
      %902 = vmatpush.bf16.msra.mxu0 0
      %903 = vmatpush.bf16.msra.mxu0 %v894
      %904 = vmatmul.bf16.gmra.mxu0 %v891
      %v905 = vpop.f32.mrf.mxu0
      %v906 = vadd.f32 0.0, %v905
      %v907 = vpop.f32.mrf.mxu0
      %908 = vdwg.mxu0
      %909 = vrot.lane.b32.xlu0 %v796, 104
      %v910 = vpop.permute.xlu0 %909
      %911 = vrot.lane.b32.xlu0 %v737, 72
      %v912 = vpop.permute.xlu0 %911
      %v914 = vsel %vm740, %v910, 0
      %v917 = vsel %vm740, %v912, 0
      %919 = vmatpush.bf16.xpose.msra.mxu0 0
      %920 = vmatpush.bf16.xpose.msra.mxu0 0
      %921 = vmatpush.bf16.xpose.msra.mxu0 0
      %922 = vmatpush.bf16.xpose.msra.mxu0 0
      %923 = vmatpush.bf16.xpose.msra.mxu0 0
      %924 = vmatpush.bf16.xpose.msra.mxu0 0
      %925 = vmatpush.bf16.xpose.msra.mxu0 0
      %926 = vmatpush.bf16.xpose.msra.mxu0 %v917
      %927 = vmatmul.bf16.gmra.mxu0 %v914
      %v928 = vpop.f32.mrf.mxu0
      %v929 = vadd.f32 %v731, %v928
      %v930 = vpop.f32.mrf.mxu0
      %931 = vdwg.mxu0
      %v932 = vsel %vm740, %v929, -inf
      %933 = vmax.xlane.f32.xlu0 %v932
      %v934 = vpop.xlane.xlu0 %933
      %v935 = vsub.f32 %v929, %v934
      %v936 = vmul.f32 %v935, 1.442695
      %v937 = vpow.pop %v936
      %v938 = vsel %vm740, %v937, 0.0
      %939 = vadd.xlane.f32.xlu0 %v938
      %v940 = vpop.xlane.xlu0 %939
      %v941 = vrcp.pop %v940
      %v942 = vmul.f32 %v937, %v941
      %v943 = vpack.c.bf16 %v942, %v942
      %944 = vrot.lane.b32.xlu0 %v737, 40
      %v945 = vpop.permute.xlu0 %944
      %v947 = vsel %vm740, %v943, 0
      %v950 = vsel %vm777, %v945, 0
      %952 = vmatpush.bf16.msra.mxu0 0
      %953 = vmatpush.bf16.msra.mxu0 0
      %954 = vmatpush.bf16.msra.mxu0 0
      %955 = vmatpush.bf16.msra.mxu0 0
      %956 = vmatpush.bf16.msra.mxu0 0
      %957 = vmatpush.bf16.msra.mxu0 0
      %958 = vmatpush.bf16.msra.mxu0 0
      %959 = vmatpush.bf16.msra.mxu0 %v950
      %960 = vmatmul.bf16.gmra.mxu0 %v947
      %v961 = vpop.f32.mrf.mxu0
      %v962 = vadd.f32 0.0, %v961
      %v963 = vpop.f32.mrf.mxu0
      %964 = vdwg.mxu0
      %966 = vrot.lane.b32.xlu0 %v850, 8
      %v967 = vpop.permute.xlu0 %966
      %970 = vrot.lane.b32.xlu0 %v906, 16
      %v971 = vpop.permute.xlu0 %970
      %974 = vrot.lane.b32.xlu0 %v962, 24
      %v975 = vpop.permute.xlu0 %974
      %v977 = vsel %vm740, %v791, %v967
      %vm978 = vcmask 130048
      %v979 = vsel %vm978, %v977, %v971
      %vm980 = vcmask 195584
      %v981 = vsel %vm980, %v979, %v975
      %v982 = vpack.c.bf16 %v981, %v981
      %v983 = vld [vmem:[%s604] sm:$0xf]
      %v984 = vld [vmem:[%s604 + $0x4] sm:$0xf]
      %v985 = vld [vmem:[%s604 + $0x8] sm:$0xf]
      %v986 = vld [vmem:[%s604 + $0xc] sm:$0xf]
      %v987 = vld [vmem:[%s607] sm:$0x1]
      %v989 = vperm.slane %v987, 0
      %v995 = vunpack.c.l.b16 %v983
      %v996 = vunpack.c.l.b16 %v984
      %v997 = vunpack.c.l.b16 %v985
      %v998 = vunpack.c.l.b16 %v986
      %v999 = vpack.c.b16 %v996, %v995
      %v1000 = vpack.c.b16 %v998, %v997
      %v1004 = vsel %vm651, %v982, 0
      %1006 = vmatpush.bf16.msra.mxu0 0
      %1007 = vmatpush.bf16.msra.mxu0 0
      %1008 = vmatpush.bf16.msra.mxu0 0
      %1009 = vmatpush.bf16.msra.mxu0 0
      %1010 = vmatpush.bf16.msra.mxu0 0
      %1011 = vmatpush.bf16.msra.mxu0 0
      %1012 = vmatpush.bf16.msra.mxu0 %v1000
      %1013 = vmatpush.bf16.msra.mxu0 %v999
      %1014 = vmatmul.bf16.gmra.mxu0 %v1004
      %v1015 = vpop.f32.mrf.mxu0
      %v1016 = vadd.f32 %v989, %v1015
      %v1017 = vpop.f32.mrf.mxu0
      %1018 = vdwg.mxu0
      %v1019 = vadd.f32 %v648, %v1016
      %v1020 = vld [vmem:[%s616] sm:$0x1]
      %v1021 = vld [vmem:[%s619] sm:$0x1]
      %v1022 = vsel %vm651, %v1019, 0.0
      %1023 = vadd.xlane.f32.xlu0 %v1022
      %v1024 = vpop.xlane.xlu0 %1023
      %v1025 = vmul.f32 %v1024, %v661
      %v1026 = vsub.f32 %v1019, %v1025
      %v1027 = vmul.f32 %v1026, %v1026
      %v1028 = vsel %vm651, %v1027, 0.0
      %1029 = vadd.xlane.f32.xlu0 %v1028
      %v1030 = vpop.xlane.xlu0 %1029
      %v1031 = vmul.f32 %v1030, %v661
      %v1032 = vadd.f32 %v1031, 1e-05
      %v1033 = vrsqrt.pop %v1032
      %v1034 = vmul.f32 %v1033, %v1032
      %v1035 = vmul.f32 %v1034, %v1033
      %v1036 = vmul.f32 0.5, %v1035
      %v1037 = vsub.f32 1.5, %v1036
      %v1038 = vmul.f32 %v1033, %v1037
      %vm1039 = vweird.f32 %v1032
      %vm1040 = vweird.f32 %v1033
      %vm1041 = vmor %vm1039, %vm1040
      %v1042 = vsel %vm1041, %v1033, %v1038
      %v1043 = vmul.f32 %v1026, %v1042
      %v1045 = vperm.slane %v1020, 0
      %v1047 = vmul.f32 %v1043, %v1045
      %v1049 = vperm.slane %v1021, 0
      %v1051 = vadd.f32 %v1047, %v1049
      %v1052 = vpack.c.bf16 %v1051, %v1051
      %v1053 = vld [vmem:[%s624] sm:$0xf]
      %v1054 = vld [vmem:[%s624 + $0x4] sm:$0xf]
      %v1055 = vld [vmem:[%s624 + $0x8] sm:$0xf]
      %v1056 = vld [vmem:[%s624 + $0xc] sm:$0xf]
      %v1057 = vld [vmem:[%s627] sm:$0x1]
      %v1059 = vperm.slane %v1057, 0
      %v1065 = vunpack.c.l.b16 %v1053
      %v1066 = vunpack.c.l.b16 %v1054
      %v1067 = vunpack.c.l.b16 %v1055
      %v1068 = vunpack.c.l.b16 %v1056
      %v1069 = vpack.c.b16 %v1066, %v1065
      %v1070 = vpack.c.b16 %v1068, %v1067
      %v1074 = vsel %vm651, %v1052, 0
      %1076 = vmatpush.bf16.msra.mxu0 0
      %1077 = vmatpush.bf16.msra.mxu0 0
      %1078 = vmatpush.bf16.msra.mxu0 0
      %1079 = vmatpush.bf16.msra.mxu0 0
      %1080 = vmatpush.bf16.msra.mxu0 0
      %1081 = vmatpush.bf16.msra.mxu0 0
      %1082 = vmatpush.bf16.msra.mxu0 %v1070
      %1083 = vmatpush.bf16.msra.mxu0 %v1069
      %1084 = vmatmul.bf16.gmra.mxu0 %v1074
      %v1085 = vpop.f32.mrf.mxu0
      %v1086 = vadd.f32 %v1059, %v1085
      %v1087 = vpop.f32.mrf.mxu0
      %1088 = vdwg.mxu0
      %v1089 = vmul.f32 %v1086, 1.702
      %v1090 = vxor.u32 %v1089, 2147483648
      %v1091 = vmul.f32 %v1090, 1.442695
      %v1092 = vpow.pop %v1091
      %v1093 = vadd.f32 %v1092, 1.0
      %v1094 = vrcp.pop %v1093
      %v1095 = vmul.f32 %v1093, %v1094
      %v1096 = vsub.f32 1.0, %v1095
      %v1097 = vmul.f32 %v1094, %v1096
      %v1098 = vadd.f32 %v1094, %v1097
      %vm1099 = vweird.f32 %v1093
      %vm1100 = vweird.f32 %v1094
      %vm1101 = vmor %vm1099, %vm1100
      %v1102 = vsel %vm1101, %v1094, %v1098
      %v1103 = vand.u32 2147483647, %v1093
      %vm1104 = vcmp.eq.f32.partialorder %v1103, 8.507059e+37
      %v1105 = vand.u32 %v1093, 2147483648
      %v1106 = vor.u32 1.1754944e-38, %v1105
      %v1107 = vsel %vm1104, %v1106, %v1102
      %v1108 = vmul.f32 1.0, %v1107
      %v1109 = vmul.f32 %v1086, %v1108
      %v1110 = vpack.c.bf16 %v1109, %v1109
      %v1111 = vld [vmem:[%s632] sm:$0xf]
      %v1112 = vld [vmem:[%s632 + $0x4] sm:$0xf]
      %v1113 = vld [vmem:[%s632 + $0x8] sm:$0xf]
      %v1114 = vld [vmem:[%s632 + $0xc] sm:$0xf]
      %v1115 = vld [vmem:[%s632 + $0x10] sm:$0xf]
      %v1116 = vld [vmem:[%s632 + $0x14] sm:$0xf]
      %v1117 = vld [vmem:[%s632 + $0x18] sm:$0xf]
      %v1118 = vld [vmem:[%s632 + $0x1c] sm:$0xf]
      %v1119 = vld [vmem:[%s632 + $0x20] sm:$0xf]
      %v1120 = vld [vmem:[%s632 + $0x24] sm:$0xf]
      %v1121 = vld [vmem:[%s632 + $0x28] sm:$0xf]
      %v1122 = vld [vmem:[%s632 + $0x2c] sm:$0xf]
      %v1123 = vld [vmem:[%s632 + $0x30] sm:$0xf]
      %v1124 = vld [vmem:[%s632 + $0x34] sm:$0xf]
      %v1125 = vld [vmem:[%s632 + $0x38] sm:$0xf]
      %v1126 = vld [vmem:[%s632 + $0x3c] sm:$0xf]
      %v1127 = vld [vmem:[%s635] sm:$0x1]
      %v1129 = vperm.slane %v1127, 0
      %v1147 = vunpack.c.l.b16 %v1111
      %v1148 = vunpack.c.l.b16 %v1112
      %v1149 = vunpack.c.l.b16 %v1113
      %v1150 = vunpack.c.l.b16 %v1114
      %v1151 = vunpack.c.l.b16 %v1115
      %v1152 = vunpack.c.l.b16 %v1116
      %v1153 = vunpack.c.l.b16 %v1117
      %v1154 = vunpack.c.l.b16 %v1118
      %v1155 = vunpack.c.l.b16 %v1119
      %v1156 = vunpack.c.l.b16 %v1120
      %v1157 = vunpack.c.l.b16 %v1121
      %v1158 = vunpack.c.l.b16 %v1122
      %v1159 = vunpack.c.l.b16 %v1123
      %v1160 = vunpack.c.l.b16 %v1124
      %v1161 = vunpack.c.l.b16 %v1125
      %v1162 = vunpack.c.l.b16 %v1126
      %v1163 = vpack.c.b16 %v1148, %v1147
      %v1164 = vpack.c.b16 %v1150, %v1149
      %v1165 = vpack.c.b16 %v1152, %v1151
      %v1166 = vpack.c.b16 %v1154, %v1153
      %v1167 = vpack.c.b16 %v1156, %v1155
      %v1168 = vpack.c.b16 %v1158, %v1157
      %v1169 = vpack.c.b16 %v1160, %v1159
      %v1170 = vpack.c.b16 %v1162, %v1161
      %1179 = vmatpush.bf16.msra.mxu0 %v1170
      %1180 = vmatpush.bf16.msra.mxu0 %v1169
      %1181 = vmatpush.bf16.msra.mxu0 %v1168
      %1182 = vmatpush.bf16.msra.mxu0 %v1167
      %1183 = vmatpush.bf16.msra.mxu0 %v1166
      %1184 = vmatpush.bf16.msra.mxu0 %v1165
      %1185 = vmatpush.bf16.msra.mxu0 %v1164
      %1186 = vmatpush.bf16.msra.mxu0 %v1163
      %1187 = vmatmul.bf16.gmra.mxu0 %v1110
      %v1188 = vpop.f32.mrf.mxu0
      %v1189 = vadd.f32 %v1129, %v1188
      %v1190 = vpop.f32.mrf.mxu0
      %1191 = vdwg.mxu0
      %v1192 = vadd.f32 %v1019, %v1189
      %1193 = vst.msk [vmem:[%s639] sm:$0xff] %vm651, %v1192
      %p1194 = scmp.lt.s32.totalorder %s28, 1
      %s1195 = scalar_select %p1194, %s28, 1
      %s1196 = smul.addr %s1195, 8
      %s1197 = scalar_lea.vmem %s13, %s1196
      // Predicated region
      $region77: #{clip_text_encode.2} parent=71 // pred_check
        %p1198 = pneg %p392
      $region78: #{clip_text_encode.2} parent=71 // pred_check_branch
        %1200 = sbr.rel (%p1198) target = $region80
      $region79: #{clip_text_encode.2} parent=71 // pred_region
        _
      $region80: #{clip_text_encode.2} parent=71 // pred_fallthru
        _
    $region72: #{clip_text_encode.2} parent=5 // pred_fallthru
      _
    %p1201 = scmp.le.s32.totalorder 2, %s19
    // Predicated region
    $region81: #{clip_text_encode.2} parent=5 // pred_check
      %p1202 = pneg %p1201
    $region82: #{clip_text_encode.2} parent=5 // pred_check_branch
      %1204 = sbr.rel (%p1202) target = $region84
    $region83: #{clip_text_encode.2} parent=5 // pred_region
      %s1205 = ssub.s32 %s19, 2
      // Predicated region
      $region85: #{clip_text_encode.2} parent=83 // pred_check
        %p1206 = pneg %p398
      $region86: #{clip_text_encode.2} parent=83 // pred_check_branch
        %1208 = sbr.rel (%p1206) target = $region88
      $region87: #{clip_text_encode.2} parent=83 // pred_region
        %p1209 = scmp.lt.s32.totalorder %s30, 1
        %s1210 = scalar_select %p1209, %s30, 1
        %s1211 = smul.addr %s1210, 8
        %s1212 = scalar_lea.vmem %s13, %s1211
      $region88: #{clip_text_encode.2} parent=83 // pred_fallthru
        _
    $region84: #{clip_text_encode.2} parent=5 // pred_fallthru
      _
  $region6: #{clip_text_encode.2} parent=0 // loop_footer
    %s23 = sadd.s32 1, %s19
  $region7: #{clip_text_encode.2} parent=0 // loop_footer_branch
    %18 = sbr.rel target = $region3
  $region8: #{clip_text_encode.2} parent=0 // loop_exit
    _

</llo_original>
